<compile_context>
chip_gen: v6e
topology: v6e:2x2x1
jax: 0.10.0
libtpu: 0.0.40
codegen_flags: <defaults>
</compile_context>

<pallas_src>
import functools

import jax
import jax.numpy as jnp
from jax import lax
from jax.experimental import pallas as pl
from jax.experimental.pallas import tpu as pltpu

EMB_DIM = 100   # nn.Embedding(n_chars, 100)
E_PAD = 128     # embedding dim zero-padded to a full lane width
NEG_BIG = -1e30


def _round_up(x, m):
    return ((x + m - 1) // m) * m


def rnn_kernel(S, B, Bp, H,
               emb_ref, wx_ref, wblk_ref, ball_ref,
               wae_ref, wa12_ref, ba_ref,
               wo_ref, bo_ref,
               out_ref,
               l12_ref):
    H2 = 2 * H

    # ---- hoisted input projection + biases: all timesteps in ONE matmul, kept as SSA ----
    # column layout is gate-interleaved [i1 i2 | f1 f2 | g1 g2 | o1 o2]; layer-2 input
    # columns of wx are zero, so layer-2 only sees its biases here.
    xwb = (jnp.dot(emb_ref[...], wx_ref[...], preferred_element_type=jnp.float32)
           + ball_ref[...])                                    # (S*Bp, 8H)

    wblk = wblk_ref[...]                                       # (2H, 8H) fused recurrent weight

    def packed_step(hc, cc, pre):
        # ONE matmul drives BOTH LSTM layers (layer 2 lags layer 1 by one step).
        g_all = pre + jnp.dot(hc, wblk, preferred_element_type=jnp.float32)   # (Bp, 8H)
        sg = jax.nn.sigmoid(g_all)      # whole-vreg EUP, slices afterwards
        th = jnp.tanh(g_all)
        i = sg[:, 0:H2]
        f = sg[:, H2:2 * H2]
        g = th[:, 2 * H2:3 * H2]
        o = sg[:, 3 * H2:4 * H2]
        cc_new = f * cc + i * g
        hc_new = o * jnp.tanh(cc_new)
        return hc_new, cc_new

    zero_hc = jnp.zeros((Bp, H2), jnp.float32)
    lane = lax.broadcasted_iota(jnp.int32, (Bp, H2), 1)
    l1_half = lane < H                                         # layer-1 lanes of packed state

    # prologue: layer-1 step 0 (zero initial state). The layer-2 half of the packed state
    # must stay zero so layer 2's real step 0 starts from the correct initial state.
    hc, cc = packed_step(zero_hc, zero_hc, xwb[0:Bp, :])
    hc = jnp.where(l1_half, hc, 0.0)
    cc = jnp.where(l1_half, cc, 0.0)
    l12_ref[0:Bp, 0:H] = hc[:, 0:H]                            # l1 row 0

    # fully static, fully unrolled recurrence (Python loop → static slices everywhere)
    for t in range(1, S):
        hc, cc = packed_step(hc, cc, xwb[t * Bp:(t + 1) * Bp, :])
        l12_ref[t * Bp:(t + 1) * Bp, 0:H] = hc[:, 0:H]         # l1 row t     (= h1_t)
        l12_ref[(t - 1) * Bp:t * Bp, H:H2] = hc[:, H:H2]       # l2 row t - 1 (= h2_{t-1})

    # epilogue: layer-2 step S-1 (the layer-1 half of this extra packed step is discarded)
    hc, cc = packed_step(hc, cc, ball_ref[...])
    l12_ref[(S - 1) * Bp:S * Bp, H:H2] = hc[:, H:H2]

    Ca = ba_ref.shape[-1]     # lane-padded attn width
    C = bo_ref.shape[-1]      # lane-padded class width

    # attn(cat([emb, l1, l2], dim=2)) as two split matmuls (emb part + merged l1|l2 slab),
    # all lane-padded, all on the 2-D (S*Bp, ·) layout.
    attn = (jnp.dot(emb_ref[...], wae_ref[...], preferred_element_type=jnp.float32)
            + jnp.dot(l12_ref[...], wa12_ref[...], preferred_element_type=jnp.float32)
            + ba_ref[...])                                     # (S*Bp, Ca)

    # F.softmax(..., dim=0) over the sequence axis (exact division for argmax-index parity)
    attn3 = attn.reshape(S, Bp, Ca)
    attn3 = attn3 - jnp.max(attn3, axis=0, keepdims=True)
    e = jnp.exp(attn3)
    attn_w = e / jnp.sum(e, axis=0, keepdims=True)

    # output Linear (padded wo rows are zero; padded class columns carry a -1e30 bias)
    out = (jnp.dot(attn_w.reshape(S * Bp, Ca), wo_ref[...],
                   preferred_element_type=jnp.float32) + bo_ref[...])   # (S*Bp, C)

    # Softmax(dim=2) — KEPT: the argmax is over dim=1 (batch), not the softmax axis, so the
    # per-(s,b) normalization changes which batch element wins. Padded class columns have
    # logit -1e30 → exp 0 → they don't perturb the denominator.
    out3 = out.reshape(S, Bp, C)
    out3 = out3 - jnp.max(out3, axis=2, keepdims=True)
    p = jnp.exp(out3)
    probs = p / jnp.sum(p, axis=2, keepdims=True)

    # torch.argmax(output, dim=1): first index of the max over the REAL batch rows;
    # padded batch rows are masked so they can never win.
    ids = lax.broadcasted_iota(jnp.int32, probs.shape, 1)
    pm = jnp.where(ids < B, probs, -1.0)
    mx = jnp.max(pm, axis=1, keepdims=True)
    arg = jnp.min(jnp.where(pm == mx, ids, Bp), axis=1)        # (S, C)
    out_ref[...] = arg.astype(out_ref.dtype)


def _interleave_gates(a, b, H):
    """Column-interleave two (..., 4H) gate blocks (torch gate order i,f,g,o) into
    (..., 8H) with layout [i_a i_b | f_a f_b | g_a g_b | o_a o_b]."""
    parts = []
    for k in range(4):
        parts.append(a[..., k * H:(k + 1) * H])
        parts.append(b[..., k * H:(k + 1) * H])
    return jnp.concatenate(parts, axis=-1)


def init_params(key, n_chars, hidden):
    ks = jax.random.split(key, 16)
    u = lambda k, shape, s=0.1: jax.random.uniform(k, shape, jnp.float32, -1.0, 1.0) * s
    return {
        "emb":   u(ks[0], (n_chars, EMB_DIM), 1.0),
        "wih1":  u(ks[1], (4 * hidden, EMB_DIM)),
        "whh1":  u(ks[2], (4 * hidden, hidden)),
        "bih1":  u(ks[3], (4 * hidden,)),
        "bhh1":  u(ks[4], (4 * hidden,)),
        "wih2":  u(ks[5], (4 * hidden, hidden)),
        "whh2":  u(ks[6], (4 * hidden, hidden)),
        "bih2":  u(ks[7], (4 * hidden,)),
        "bhh2":  u(ks[8], (4 * hidden,)),
        "wattn": u(ks[9], (n_chars + 2 * hidden, EMB_DIM + 2 * hidden)),  # (out, in) torch conv.
        "battn": u(ks[10], (n_chars + 2 * hidden,)),
        "wout":  u(ks[11], (n_chars, n_chars + 2 * hidden)),
        "bout":  u(ks[12], (n_chars,)),
    }


def rnn_forward(params, x, *, n_chars, hidden):
    S, B = x.shape
    H = hidden
    Bp = max(8, _round_up(B, 8))                # batch padded to a sublane tile
    Ca = n_chars + 2 * H
    Ca_pad = _round_up(Ca, 128)                 # attn width lane-padded
    C_pad = _round_up(n_chars, 128)             # class width lane-padded
    f32 = jnp.float32

    # ---- glue: embedding gather, batch padding, weight packing / padding ----
    emb_tab = jnp.pad(params["emb"].astype(f32), ((0, 0), (0, E_PAD - EMB_DIM)))
    emb3 = emb_tab[x]                                               # (S, B, 128)
    emb3 = jnp.pad(emb3, ((0, 0), (0, Bp - B), (0, 0)))             # zero rows for padded batch
    emb = emb3.reshape(S * Bp, E_PAD)

    # layer-1 input projection, gate-interleaved with zero layer-2 columns -> (128, 8H)
    wih1_t = jnp.pad(params["wih1"].T.astype(f32), ((0, E_PAD - EMB_DIM), (0, 0)))
    wx = _interleave_gates(wih1_t, jnp.zeros((E_PAD, 4 * H), f32), H)

    # fused recurrent block weight: rows 0:H act on h1, rows H:2H act on h2 -> (2H, 8H)
    top = _interleave_gates(params["whh1"].T.astype(f32), params["wih2"].T.astype(f32), H)
    bot = _interleave_gates(jnp.zeros((H, 4 * H), f32), params["whh2"].T.astype(f32), H)
    wblk = jnp.concatenate([top, bot], axis=0)

    b1 = (params["bih1"] + params["bhh1"]).astype(f32)[None, :]
    b2 = (params["bih2"] + params["bhh2"]).astype(f32)[None, :]
    ball = _interleave_gates(b1, b2, H)                             # (1, 8H)

    # attention weights: emb part / merged (l1,l2) part, lane-padded to Ca_pad
    wattn_t = params["wattn"].T.astype(f32)                         # (100 + 2H, Ca)
    wae = jnp.pad(wattn_t[:EMB_DIM, :], ((0, E_PAD - EMB_DIM), (0, Ca_pad - Ca)))
    wa12 = jnp.pad(wattn_t[EMB_DIM:, :], ((0, 0), (0, Ca_pad - Ca)))   # (2H, Ca_pad)
    ba = jnp.pad(params["battn"].astype(f32)[None, :], ((0, 0), (0, Ca_pad - Ca)))

    # output Linear: zero-pad input rows to Ca_pad, classes to C_pad; padded class columns
    # get a -1e30 bias so the dim=2 softmax ignores them exactly.
    wo = jnp.pad(params["wout"].T.astype(f32),
                 ((0, Ca_pad - Ca), (0, C_pad - n_chars)))
    bo = jnp.pad(params["bout"].astype(f32)[None, :],
                 ((0, 0), (0, C_pad - n_chars)), constant_values=NEG_BIG)

    args = (emb, wx, wblk, ball, wae, wa12, ba, wo, bo)

    kernel = functools.partial(rnn_kernel, S, B, Bp, H)
    out = pl.pallas_call(
        kernel,
        out_shape=jax.ShapeDtypeStruct((S, C_pad), jnp.float32),
        in_specs=[pl.BlockSpec(memory_space=pltpu.MemorySpace.VMEM)] * len(args),
        out_specs=pl.BlockSpec(memory_space=pltpu.MemorySpace.VMEM),
        scratch_shapes=[pltpu.VMEM((S * Bp, 2 * H), jnp.float32)],   # merged l1|l2 slab
        compiler_params=pltpu.CompilerParams(vmem_limit_bytes=32 * 1024 * 1024),
    )(*args)
    # TODO(synk): torch returns float64 (.double()); f64 is not TPU-native, so the kernel
    # emits the argmax indices as float32.
    return out[:, :n_chars]


if __name__ == "__main__":
    n_chars, hidden = 12, 32
    S, B = 8, 2  # (seq, batch), PyTorch LSTM default layout

    key = jax.random.PRNGKey(0)
    kp, kx = jax.random.split(key)
    params = init_params(kp, n_chars, hidden)
    x = jax.random.randint(kx, (S, B), 0, n_chars, dtype=jnp.int32)

    out = rnn_forward(params, x, n_chars=n_chars, hidden=hidden)
    jax.block_until_ready(out)
    assert out.shape == (S, n_chars), out.shape
    print("KERNEL_OK")
</pallas_src>

<mosaic_0001>
module attributes {stable_mosaic.version = 11 : i64} {
  func.func @rnn_kernel(%arg0: memref<64x128xf32, #tpu.memory_space<vmem>>, %arg1: memref<128x256xf32, #tpu.memory_space<vmem>>, %arg2: memref<64x256xf32, #tpu.memory_space<vmem>>, %arg3: memref<1x256xf32, #tpu.memory_space<vmem>>, %arg4: memref<128x128xf32, #tpu.memory_space<vmem>>, %arg5: memref<64x128xf32, #tpu.memory_space<vmem>>, %arg6: memref<1x128xf32, #tpu.memory_space<vmem>>, %arg7: memref<128x128xf32, #tpu.memory_space<vmem>>, %arg8: memref<1x128xf32, #tpu.memory_space<vmem>>, %arg9: memref<8x128xf32, #tpu.memory_space<vmem>>, %arg10: memref<64x64xf32, #tpu.memory_space<vmem>>) attributes {dimension_semantics = [], scalar_prefetch = 0 : i64, scratch_operands = 1 : i64, tpu.core_type = #tpu.core_type<tc>} {
    %c0 = arith.constant 0 : index
    %c0_0 = arith.constant 0 : index
    %0 = vector.load %arg0[%c0, %c0_0] : memref<64x128xf32, #tpu.memory_space<vmem>>, vector<64x128xf32>
    %c0_1 = arith.constant 0 : index
    %c0_2 = arith.constant 0 : index
    %1 = vector.load %arg1[%c0_1, %c0_2] : memref<128x256xf32, #tpu.memory_space<vmem>>, vector<128x256xf32>
    %cst = arith.constant dense<0.000000e+00> : vector<64x256xf32>
    %2 = tpu.matmul %0, %1, %cst {dimension_numbers = #tpu.dot_dimension_numbers<[1], [0], [0], [1], [0, 0, 1, 1], [], []>} : vector<64x128xf32>, vector<128x256xf32>, vector<64x256xf32> -> vector<64x256xf32>
    %c0_3 = arith.constant 0 : index
    %c0_4 = arith.constant 0 : index
    %3 = vector.load %arg3[%c0_3, %c0_4] : memref<1x256xf32, #tpu.memory_space<vmem>>, vector<1x256xf32>
    %4 = vector.broadcast %3 : vector<1x256xf32> to vector<64x256xf32>
    %5 = arith.addf %2, %4 : vector<64x256xf32>
    %c0_5 = arith.constant 0 : index
    %c0_6 = arith.constant 0 : index
    %6 = vector.load %arg2[%c0_5, %c0_6] : memref<64x256xf32, #tpu.memory_space<vmem>>, vector<64x256xf32>
    %cst_7 = arith.constant 0.000000e+00 : f32
    %7 = vector.broadcast %cst_7 : f32 to vector<8x64xf32>
    %8 = tpu.iota {dimensions = array<i32: 1>} : vector<8x64xi32>
    %c32_i32 = arith.constant 32 : i32
    %9 = vector.broadcast %c32_i32 : i32 to vector<8x64xi32>
    %10 = arith.cmpi slt, %8, %9 : vector<8x64xi32>
    %11 = vector.extract_strided_slice %5 {offsets = [0, 0], sizes = [8, 256], strides = [1, 1]} : vector<64x256xf32> to vector<8x256xf32>
    %cst_8 = arith.constant dense<0.000000e+00> : vector<8x256xf32>
    %12 = tpu.matmul %7, %6, %cst_8 {dimension_numbers = #tpu.dot_dimension_numbers<[1], [0], [0], [1], [0, 0, 1, 1], [], []>} : vector<8x64xf32>, vector<64x256xf32>, vector<8x256xf32> -> vector<8x256xf32>
    %13 = arith.addf %11, %12 : vector<8x256xf32>
    %14 = arith.negf %13 : vector<8x256xf32>
    %15 = math.exp %14 : vector<8x256xf32>
    %cst_9 = arith.constant 1.000000e+00 : f32
    %16 = vector.broadcast %cst_9 : f32 to vector<8x256xf32>
    %17 = arith.addf %16, %15 : vector<8x256xf32>
    %18 = arith.divf %16, %17 : vector<8x256xf32>
    %19 = math.tanh %13 : vector<8x256xf32>
    %20 = vector.extract_strided_slice %18 {offsets = [0, 0], sizes = [8, 64], strides = [1, 1]} : vector<8x256xf32> to vector<8x64xf32>
    %21 = vector.extract_strided_slice %18 {offsets = [0, 64], sizes = [8, 64], strides = [1, 1]} : vector<8x256xf32> to vector<8x64xf32>
    %22 = vector.extract_strided_slice %19 {offsets = [0, 128], sizes = [8, 64], strides = [1, 1]} : vector<8x256xf32> to vector<8x64xf32>
    %23 = vector.extract_strided_slice %18 {offsets = [0, 192], sizes = [8, 64], strides = [1, 1]} : vector<8x256xf32> to vector<8x64xf32>
    %24 = arith.mulf %21, %7 : vector<8x64xf32>
    %25 = arith.mulf %20, %22 : vector<8x64xf32>
    %26 = arith.addf %24, %25 : vector<8x64xf32>
    %27 = math.tanh %26 : vector<8x64xf32>
    %28 = arith.mulf %23, %27 : vector<8x64xf32>
    %cst_10 = arith.constant 0.000000e+00 : f32
    %29 = vector.broadcast %cst_10 : f32 to vector<8x64xf32>
    %30 = arith.select %10, %28, %29 : vector<8x64xi1>, vector<8x64xf32>
    %cst_11 = arith.constant 0.000000e+00 : f32
    %31 = vector.broadcast %cst_11 : f32 to vector<8x64xf32>
    %32 = arith.select %10, %26, %31 : vector<8x64xi1>, vector<8x64xf32>
    %33 = vector.extract_strided_slice %30 {offsets = [0, 0], sizes = [8, 32], strides = [1, 1]} : vector<8x64xf32> to vector<8x32xf32>
    %c0_12 = arith.constant 0 : index
    %c0_13 = arith.constant 0 : index
    %34 = vector.load %arg10[%c0_12, %c0_13] : memref<64x64xf32, #tpu.memory_space<vmem>>, vector<8x32xf32>
    tpu.vector_store %arg10[%c0_12, %c0_13], %33 {strides = array<i32>} : memref<64x64xf32, #tpu.memory_space<vmem>>, vector<8x32xf32>,
    %35 = vector.extract_strided_slice %5 {offsets = [8, 0], sizes = [8, 256], strides = [1, 1]} : vector<64x256xf32> to vector<8x256xf32>
    %cst_14 = arith.constant dense<0.000000e+00> : vector<8x256xf32>
    %36 = tpu.matmul %30, %6, %cst_14 {dimension_numbers = #tpu.dot_dimension_numbers<[1], [0], [0], [1], [0, 0, 1, 1], [], []>} : vector<8x64xf32>, vector<64x256xf32>, vector<8x256xf32> -> vector<8x256xf32>
    %37 = arith.addf %35, %36 : vector<8x256xf32>
    %38 = arith.negf %37 : vector<8x256xf32>
    %39 = math.exp %38 : vector<8x256xf32>
    %cst_15 = arith.constant 1.000000e+00 : f32
    %40 = vector.broadcast %cst_15 : f32 to vector<8x256xf32>
    %41 = arith.addf %40, %39 : vector<8x256xf32>
    %42 = arith.divf %40, %41 : vector<8x256xf32>
    %43 = math.tanh %37 : vector<8x256xf32>
    %44 = vector.extract_strided_slice %42 {offsets = [0, 0], sizes = [8, 64], strides = [1, 1]} : vector<8x256xf32> to vector<8x64xf32>
    %45 = vector.extract_strided_slice %42 {offsets = [0, 64], sizes = [8, 64], strides = [1, 1]} : vector<8x256xf32> to vector<8x64xf32>
    %46 = vector.extract_strided_slice %43 {offsets = [0, 128], sizes = [8, 64], strides = [1, 1]} : vector<8x256xf32> to vector<8x64xf32>
    %47 = vector.extract_strided_slice %42 {offsets = [0, 192], sizes = [8, 64], strides = [1, 1]} : vector<8x256xf32> to vector<8x64xf32>
    %48 = arith.mulf %45, %32 : vector<8x64xf32>
    %49 = arith.mulf %44, %46 : vector<8x64xf32>
    %50 = arith.addf %48, %49 : vector<8x64xf32>
    %51 = math.tanh %50 : vector<8x64xf32>
    %52 = arith.mulf %47, %51 : vector<8x64xf32>
    %53 = vector.extract_strided_slice %52 {offsets = [0, 0], sizes = [8, 32], strides = [1, 1]} : vector<8x64xf32> to vector<8x32xf32>
    %c8 = arith.constant 8 : index
    %c0_16 = arith.constant 0 : index
    %54 = vector.load %arg10[%c8, %c0_16] : memref<64x64xf32, #tpu.memory_space<vmem>>, vector<8x32xf32>
    tpu.vector_store %arg10[%c8, %c0_16], %53 {strides = array<i32>} : memref<64x64xf32, #tpu.memory_space<vmem>>, vector<8x32xf32>,
    %55 = vector.extract_strided_slice %52 {offsets = [0, 32], sizes = [8, 32], strides = [1, 1]} : vector<8x64xf32> to vector<8x32xf32>
    %c0_17 = arith.constant 0 : index
    %c32 = arith.constant 32 : index
    %56 = vector.load %arg10[%c0_17, %c32] : memref<64x64xf32, #tpu.memory_space<vmem>>, vector<8x32xf32>
    tpu.vector_store %arg10[%c0_17, %c32], %55 {strides = array<i32>} : memref<64x64xf32, #tpu.memory_space<vmem>>, vector<8x32xf32>,
    %57 = vector.extract_strided_slice %5 {offsets = [16, 0], sizes = [8, 256], strides = [1, 1]} : vector<64x256xf32> to vector<8x256xf32>
    %cst_18 = arith.constant dense<0.000000e+00> : vector<8x256xf32>
    %58 = tpu.matmul %52, %6, %cst_18 {dimension_numbers = #tpu.dot_dimension_numbers<[1], [0], [0], [1], [0, 0, 1, 1], [], []>} : vector<8x64xf32>, vector<64x256xf32>, vector<8x256xf32> -> vector<8x256xf32>
    %59 = arith.addf %57, %58 : vector<8x256xf32>
    %60 = arith.negf %59 : vector<8x256xf32>
    %61 = math.exp %60 : vector<8x256xf32>
    %cst_19 = arith.constant 1.000000e+00 : f32
    %62 = vector.broadcast %cst_19 : f32 to vector<8x256xf32>
    %63 = arith.addf %62, %61 : vector<8x256xf32>
    %64 = arith.divf %62, %63 : vector<8x256xf32>
    %65 = math.tanh %59 : vector<8x256xf32>
    %66 = vector.extract_strided_slice %64 {offsets = [0, 0], sizes = [8, 64], strides = [1, 1]} : vector<8x256xf32> to vector<8x64xf32>
    %67 = vector.extract_strided_slice %64 {offsets = [0, 64], sizes = [8, 64], strides = [1, 1]} : vector<8x256xf32> to vector<8x64xf32>
    %68 = vector.extract_strided_slice %65 {offsets = [0, 128], sizes = [8, 64], strides = [1, 1]} : vector<8x256xf32> to vector<8x64xf32>
    %69 = vector.extract_strided_slice %64 {offsets = [0, 192], sizes = [8, 64], strides = [1, 1]} : vector<8x256xf32> to vector<8x64xf32>
    %70 = arith.mulf %67, %50 : vector<8x64xf32>
    %71 = arith.mulf %66, %68 : vector<8x64xf32>
    %72 = arith.addf %70, %71 : vector<8x64xf32>
    %73 = math.tanh %72 : vector<8x64xf32>
    %74 = arith.mulf %69, %73 : vector<8x64xf32>
    %75 = vector.extract_strided_slice %74 {offsets = [0, 0], sizes = [8, 32], strides = [1, 1]} : vector<8x64xf32> to vector<8x32xf32>
    %c16 = arith.constant 16 : index
    %c0_20 = arith.constant 0 : index
    %76 = vector.load %arg10[%c16, %c0_20] : memref<64x64xf32, #tpu.memory_space<vmem>>, vector<8x32xf32>
    tpu.vector_store %arg10[%c16, %c0_20], %75 {strides = array<i32>} : memref<64x64xf32, #tpu.memory_space<vmem>>, vector<8x32xf32>,
    %77 = vector.extract_strided_slice %74 {offsets = [0, 32], sizes = [8, 32], strides = [1, 1]} : vector<8x64xf32> to vector<8x32xf32>
    %c8_21 = arith.constant 8 : index
    %c32_22 = arith.constant 32 : index
    %78 = vector.load %arg10[%c8_21, %c32_22] : memref<64x64xf32, #tpu.memory_space<vmem>>, vector<8x32xf32>
    tpu.vector_store %arg10[%c8_21, %c32_22], %77 {strides = array<i32>} : memref<64x64xf32, #tpu.memory_space<vmem>>, vector<8x32xf32>,
    %79 = vector.extract_strided_slice %5 {offsets = [24, 0], sizes = [8, 256], strides = [1, 1]} : vector<64x256xf32> to vector<8x256xf32>
    %cst_23 = arith.constant dense<0.000000e+00> : vector<8x256xf32>
    %80 = tpu.matmul %74, %6, %cst_23 {dimension_numbers = #tpu.dot_dimension_numbers<[1], [0], [0], [1], [0, 0, 1, 1], [], []>} : vector<8x64xf32>, vector<64x256xf32>, vector<8x256xf32> -> vector<8x256xf32>
    %81 = arith.addf %79, %80 : vector<8x256xf32>
    %82 = arith.negf %81 : vector<8x256xf32>
    %83 = math.exp %82 : vector<8x256xf32>
    %cst_24 = arith.constant 1.000000e+00 : f32
    %84 = vector.broadcast %cst_24 : f32 to vector<8x256xf32>
    %85 = arith.addf %84, %83 : vector<8x256xf32>
    %86 = arith.divf %84, %85 : vector<8x256xf32>
    %87 = math.tanh %81 : vector<8x256xf32>
    %88 = vector.extract_strided_slice %86 {offsets = [0, 0], sizes = [8, 64], strides = [1, 1]} : vector<8x256xf32> to vector<8x64xf32>
    %89 = vector.extract_strided_slice %86 {offsets = [0, 64], sizes = [8, 64], strides = [1, 1]} : vector<8x256xf32> to vector<8x64xf32>
    %90 = vector.extract_strided_slice %87 {offsets = [0, 128], sizes = [8, 64], strides = [1, 1]} : vector<8x256xf32> to vector<8x64xf32>
    %91 = vector.extract_strided_slice %86 {offsets = [0, 192], sizes = [8, 64], strides = [1, 1]} : vector<8x256xf32> to vector<8x64xf32>
    %92 = arith.mulf %89, %72 : vector<8x64xf32>
    %93 = arith.mulf %88, %90 : vector<8x64xf32>
    %94 = arith.addf %92, %93 : vector<8x64xf32>
    %95 = math.tanh %94 : vector<8x64xf32>
    %96 = arith.mulf %91, %95 : vector<8x64xf32>
    %97 = vector.extract_strided_slice %96 {offsets = [0, 0], sizes = [8, 32], strides = [1, 1]} : vector<8x64xf32> to vector<8x32xf32>
    %c24 = arith.constant 24 : index
    %c0_25 = arith.constant 0 : index
    %98 = vector.load %arg10[%c24, %c0_25] : memref<64x64xf32, #tpu.memory_space<vmem>>, vector<8x32xf32>
    tpu.vector_store %arg10[%c24, %c0_25], %97 {strides = array<i32>} : memref<64x64xf32, #tpu.memory_space<vmem>>, vector<8x32xf32>,
    %99 = vector.extract_strided_slice %96 {offsets = [0, 32], sizes = [8, 32], strides = [1, 1]} : vector<8x64xf32> to vector<8x32xf32>
    %c16_26 = arith.constant 16 : index
    %c32_27 = arith.constant 32 : index
    %100 = vector.load %arg10[%c16_26, %c32_27] : memref<64x64xf32, #tpu.memory_space<vmem>>, vector<8x32xf32>
    tpu.vector_store %arg10[%c16_26, %c32_27], %99 {strides = array<i32>} : memref<64x64xf32, #tpu.memory_space<vmem>>, vector<8x32xf32>,
    %101 = vector.extract_strided_slice %5 {offsets = [32, 0], sizes = [8, 256], strides = [1, 1]} : vector<64x256xf32> to vector<8x256xf32>
    %cst_28 = arith.constant dense<0.000000e+00> : vector<8x256xf32>
    %102 = tpu.matmul %96, %6, %cst_28 {dimension_numbers = #tpu.dot_dimension_numbers<[1], [0], [0], [1], [0, 0, 1, 1], [], []>} : vector<8x64xf32>, vector<64x256xf32>, vector<8x256xf32> -> vector<8x256xf32>
    %103 = arith.addf %101, %102 : vector<8x256xf32>
    %104 = arith.negf %103 : vector<8x256xf32>
    %105 = math.exp %104 : vector<8x256xf32>
    %cst_29 = arith.constant 1.000000e+00 : f32
    %106 = vector.broadcast %cst_29 : f32 to vector<8x256xf32>
    %107 = arith.addf %106, %105 : vector<8x256xf32>
    %108 = arith.divf %106, %107 : vector<8x256xf32>
    %109 = math.tanh %103 : vector<8x256xf32>
    %110 = vector.extract_strided_slice %108 {offsets = [0, 0], sizes = [8, 64], strides = [1, 1]} : vector<8x256xf32> to vector<8x64xf32>
    %111 = vector.extract_strided_slice %108 {offsets = [0, 64], sizes = [8, 64], strides = [1, 1]} : vector<8x256xf32> to vector<8x64xf32>
    %112 = vector.extract_strided_slice %109 {offsets = [0, 128], sizes = [8, 64], strides = [1, 1]} : vector<8x256xf32> to vector<8x64xf32>
    %113 = vector.extract_strided_slice %108 {offsets = [0, 192], sizes = [8, 64], strides = [1, 1]} : vector<8x256xf32> to vector<8x64xf32>
    %114 = arith.mulf %111, %94 : vector<8x64xf32>
    %115 = arith.mulf %110, %112 : vector<8x64xf32>
    %116 = arith.addf %114, %115 : vector<8x64xf32>
    %117 = math.tanh %116 : vector<8x64xf32>
    %118 = arith.mulf %113, %117 : vector<8x64xf32>
    %119 = vector.extract_strided_slice %118 {offsets = [0, 0], sizes = [8, 32], strides = [1, 1]} : vector<8x64xf32> to vector<8x32xf32>
    %c32_30 = arith.constant 32 : index
    %c0_31 = arith.constant 0 : index
    %120 = vector.load %arg10[%c32_30, %c0_31] : memref<64x64xf32, #tpu.memory_space<vmem>>, vector<8x32xf32>
    tpu.vector_store %arg10[%c32_30, %c0_31], %119 {strides = array<i32>} : memref<64x64xf32, #tpu.memory_space<vmem>>, vector<8x32xf32>,
    %121 = vector.extract_strided_slice %118 {offsets = [0, 32], sizes = [8, 32], strides = [1, 1]} : vector<8x64xf32> to vector<8x32xf32>
    %c24_32 = arith.constant 24 : index
    %c32_33 = arith.constant 32 : index
    %122 = vector.load %arg10[%c24_32, %c32_33] : memref<64x64xf32, #tpu.memory_space<vmem>>, vector<8x32xf32>
    tpu.vector_store %arg10[%c24_32, %c32_33], %121 {strides = array<i32>} : memref<64x64xf32, #tpu.memory_space<vmem>>, vector<8x32xf32>,
    %123 = vector.extract_strided_slice %5 {offsets = [40, 0], sizes = [8, 256], strides = [1, 1]} : vector<64x256xf32> to vector<8x256xf32>
    %cst_34 = arith.constant dense<0.000000e+00> : vector<8x256xf32>
    %124 = tpu.matmul %118, %6, %cst_34 {dimension_numbers = #tpu.dot_dimension_numbers<[1], [0], [0], [1], [0, 0, 1, 1], [], []>} : vector<8x64xf32>, vector<64x256xf32>, vector<8x256xf32> -> vector<8x256xf32>
    %125 = arith.addf %123, %124 : vector<8x256xf32>
    %126 = arith.negf %125 : vector<8x256xf32>
    %127 = math.exp %126 : vector<8x256xf32>
    %cst_35 = arith.constant 1.000000e+00 : f32
    %128 = vector.broadcast %cst_35 : f32 to vector<8x256xf32>
    %129 = arith.addf %128, %127 : vector<8x256xf32>
    %130 = arith.divf %128, %129 : vector<8x256xf32>
    %131 = math.tanh %125 : vector<8x256xf32>
    %132 = vector.extract_strided_slice %130 {offsets = [0, 0], sizes = [8, 64], strides = [1, 1]} : vector<8x256xf32> to vector<8x64xf32>
    %133 = vector.extract_strided_slice %130 {offsets = [0, 64], sizes = [8, 64], strides = [1, 1]} : vector<8x256xf32> to vector<8x64xf32>
    %134 = vector.extract_strided_slice %131 {offsets = [0, 128], sizes = [8, 64], strides = [1, 1]} : vector<8x256xf32> to vector<8x64xf32>
    %135 = vector.extract_strided_slice %130 {offsets = [0, 192], sizes = [8, 64], strides = [1, 1]} : vector<8x256xf32> to vector<8x64xf32>
    %136 = arith.mulf %133, %116 : vector<8x64xf32>
    %137 = arith.mulf %132, %134 : vector<8x64xf32>
    %138 = arith.addf %136, %137 : vector<8x64xf32>
    %139 = math.tanh %138 : vector<8x64xf32>
    %140 = arith.mulf %135, %139 : vector<8x64xf32>
    %141 = vector.extract_strided_slice %140 {offsets = [0, 0], sizes = [8, 32], strides = [1, 1]} : vector<8x64xf32> to vector<8x32xf32>
    %c40 = arith.constant 40 : index
    %c0_36 = arith.constant 0 : index
    %142 = vector.load %arg10[%c40, %c0_36] : memref<64x64xf32, #tpu.memory_space<vmem>>, vector<8x32xf32>
    tpu.vector_store %arg10[%c40, %c0_36], %141 {strides = array<i32>} : memref<64x64xf32, #tpu.memory_space<vmem>>, vector<8x32xf32>,
    %143 = vector.extract_strided_slice %140 {offsets = [0, 32], sizes = [8, 32], strides = [1, 1]} : vector<8x64xf32> to vector<8x32xf32>
    %c32_37 = arith.constant 32 : index
    %c32_38 = arith.constant 32 : index
    %144 = vector.load %arg10[%c32_37, %c32_38] : memref<64x64xf32, #tpu.memory_space<vmem>>, vector<8x32xf32>
    tpu.vector_store %arg10[%c32_37, %c32_38], %143 {strides = array<i32>} : memref<64x64xf32, #tpu.memory_space<vmem>>, vector<8x32xf32>,
    %145 = vector.extract_strided_slice %5 {offsets = [48, 0], sizes = [8, 256], strides = [1, 1]} : vector<64x256xf32> to vector<8x256xf32>
    %cst_39 = arith.constant dense<0.000000e+00> : vector<8x256xf32>
    %146 = tpu.matmul %140, %6, %cst_39 {dimension_numbers = #tpu.dot_dimension_numbers<[1], [0], [0], [1], [0, 0, 1, 1], [], []>} : vector<8x64xf32>, vector<64x256xf32>, vector<8x256xf32> -> vector<8x256xf32>
    %147 = arith.addf %145, %146 : vector<8x256xf32>
    %148 = arith.negf %147 : vector<8x256xf32>
    %149 = math.exp %148 : vector<8x256xf32>
    %cst_40 = arith.constant 1.000000e+00 : f32
    %150 = vector.broadcast %cst_40 : f32 to vector<8x256xf32>
    %151 = arith.addf %150, %149 : vector<8x256xf32>
    %152 = arith.divf %150, %151 : vector<8x256xf32>
    %153 = math.tanh %147 : vector<8x256xf32>
    %154 = vector.extract_strided_slice %152 {offsets = [0, 0], sizes = [8, 64], strides = [1, 1]} : vector<8x256xf32> to vector<8x64xf32>
    %155 = vector.extract_strided_slice %152 {offsets = [0, 64], sizes = [8, 64], strides = [1, 1]} : vector<8x256xf32> to vector<8x64xf32>
    %156 = vector.extract_strided_slice %153 {offsets = [0, 128], sizes = [8, 64], strides = [1, 1]} : vector<8x256xf32> to vector<8x64xf32>
    %157 = vector.extract_strided_slice %152 {offsets = [0, 192], sizes = [8, 64], strides = [1, 1]} : vector<8x256xf32> to vector<8x64xf32>
    %158 = arith.mulf %155, %138 : vector<8x64xf32>
    %159 = arith.mulf %154, %156 : vector<8x64xf32>
    %160 = arith.addf %158, %159 : vector<8x64xf32>
    %161 = math.tanh %160 : vector<8x64xf32>
    %162 = arith.mulf %157, %161 : vector<8x64xf32>
    %163 = vector.extract_strided_slice %162 {offsets = [0, 0], sizes = [8, 32], strides = [1, 1]} : vector<8x64xf32> to vector<8x32xf32>
    %c48 = arith.constant 48 : index
    %c0_41 = arith.constant 0 : index
    %164 = vector.load %arg10[%c48, %c0_41] : memref<64x64xf32, #tpu.memory_space<vmem>>, vector<8x32xf32>
    tpu.vector_store %arg10[%c48, %c0_41], %163 {strides = array<i32>} : memref<64x64xf32, #tpu.memory_space<vmem>>, vector<8x32xf32>,
    %165 = vector.extract_strided_slice %162 {offsets = [0, 32], sizes = [8, 32], strides = [1, 1]} : vector<8x64xf32> to vector<8x32xf32>
    %c40_42 = arith.constant 40 : index
    %c32_43 = arith.constant 32 : index
    %166 = vector.load %arg10[%c40_42, %c32_43] : memref<64x64xf32, #tpu.memory_space<vmem>>, vector<8x32xf32>
    tpu.vector_store %arg10[%c40_42, %c32_43], %165 {strides = array<i32>} : memref<64x64xf32, #tpu.memory_space<vmem>>, vector<8x32xf32>,
    %167 = vector.extract_strided_slice %5 {offsets = [56, 0], sizes = [8, 256], strides = [1, 1]} : vector<64x256xf32> to vector<8x256xf32>
    %cst_44 = arith.constant dense<0.000000e+00> : vector<8x256xf32>
    %168 = tpu.matmul %162, %6, %cst_44 {dimension_numbers = #tpu.dot_dimension_numbers<[1], [0], [0], [1], [0, 0, 1, 1], [], []>} : vector<8x64xf32>, vector<64x256xf32>, vector<8x256xf32> -> vector<8x256xf32>
    %169 = arith.addf %167, %168 : vector<8x256xf32>
    %170 = arith.negf %169 : vector<8x256xf32>
    %171 = math.exp %170 : vector<8x256xf32>
    %cst_45 = arith.constant 1.000000e+00 : f32
    %172 = vector.broadcast %cst_45 : f32 to vector<8x256xf32>
    %173 = arith.addf %172, %171 : vector<8x256xf32>
    %174 = arith.divf %172, %173 : vector<8x256xf32>
    %175 = math.tanh %169 : vector<8x256xf32>
    %176 = vector.extract_strided_slice %174 {offsets = [0, 0], sizes = [8, 64], strides = [1, 1]} : vector<8x256xf32> to vector<8x64xf32>
    %177 = vector.extract_strided_slice %174 {offsets = [0, 64], sizes = [8, 64], strides = [1, 1]} : vector<8x256xf32> to vector<8x64xf32>
    %178 = vector.extract_strided_slice %175 {offsets = [0, 128], sizes = [8, 64], strides = [1, 1]} : vector<8x256xf32> to vector<8x64xf32>
    %179 = vector.extract_strided_slice %174 {offsets = [0, 192], sizes = [8, 64], strides = [1, 1]} : vector<8x256xf32> to vector<8x64xf32>
    %180 = arith.mulf %177, %160 : vector<8x64xf32>
    %181 = arith.mulf %176, %178 : vector<8x64xf32>
    %182 = arith.addf %180, %181 : vector<8x64xf32>
    %183 = math.tanh %182 : vector<8x64xf32>
    %184 = arith.mulf %179, %183 : vector<8x64xf32>
    %185 = vector.extract_strided_slice %184 {offsets = [0, 0], sizes = [8, 32], strides = [1, 1]} : vector<8x64xf32> to vector<8x32xf32>
    %c56 = arith.constant 56 : index
    %c0_46 = arith.constant 0 : index
    %186 = vector.load %arg10[%c56, %c0_46] : memref<64x64xf32, #tpu.memory_space<vmem>>, vector<8x32xf32>
    tpu.vector_store %arg10[%c56, %c0_46], %185 {strides = array<i32>} : memref<64x64xf32, #tpu.memory_space<vmem>>, vector<8x32xf32>,
    %187 = vector.extract_strided_slice %184 {offsets = [0, 32], sizes = [8, 32], strides = [1, 1]} : vector<8x64xf32> to vector<8x32xf32>
    %c48_47 = arith.constant 48 : index
    %c32_48 = arith.constant 32 : index
    %188 = vector.load %arg10[%c48_47, %c32_48] : memref<64x64xf32, #tpu.memory_space<vmem>>, vector<8x32xf32>
    tpu.vector_store %arg10[%c48_47, %c32_48], %187 {strides = array<i32>} : memref<64x64xf32, #tpu.memory_space<vmem>>, vector<8x32xf32>,
    %c0_49 = arith.constant 0 : index
    %c0_50 = arith.constant 0 : index
    %189 = vector.load %arg3[%c0_49, %c0_50] : memref<1x256xf32, #tpu.memory_space<vmem>>, vector<1x256xf32>
    %cst_51 = arith.constant dense<0.000000e+00> : vector<8x256xf32>
    %190 = tpu.matmul %184, %6, %cst_51 {dimension_numbers = #tpu.dot_dimension_numbers<[1], [0], [0], [1], [0, 0, 1, 1], [], []>} : vector<8x64xf32>, vector<64x256xf32>, vector<8x256xf32> -> vector<8x256xf32>
    %191 = vector.broadcast %189 : vector<1x256xf32> to vector<8x256xf32>
    %192 = arith.addf %191, %190 : vector<8x256xf32>
    %193 = arith.negf %192 : vector<8x256xf32>
    %194 = math.exp %193 : vector<8x256xf32>
    %cst_52 = arith.constant 1.000000e+00 : f32
    %195 = vector.broadcast %cst_52 : f32 to vector<8x256xf32>
    %196 = arith.addf %195, %194 : vector<8x256xf32>
    %197 = arith.divf %195, %196 : vector<8x256xf32>
    %198 = math.tanh %192 : vector<8x256xf32>
    %199 = vector.extract_strided_slice %197 {offsets = [0, 0], sizes = [8, 64], strides = [1, 1]} : vector<8x256xf32> to vector<8x64xf32>
    %200 = vector.extract_strided_slice %197 {offsets = [0, 64], sizes = [8, 64], strides = [1, 1]} : vector<8x256xf32> to vector<8x64xf32>
    %201 = vector.extract_strided_slice %198 {offsets = [0, 128], sizes = [8, 64], strides = [1, 1]} : vector<8x256xf32> to vector<8x64xf32>
    %202 = vector.extract_strided_slice %197 {offsets = [0, 192], sizes = [8, 64], strides = [1, 1]} : vector<8x256xf32> to vector<8x64xf32>
    %203 = arith.mulf %200, %182 : vector<8x64xf32>
    %204 = arith.mulf %199, %201 : vector<8x64xf32>
    %205 = arith.addf %203, %204 : vector<8x64xf32>
    %206 = math.tanh %205 : vector<8x64xf32>
    %207 = arith.mulf %202, %206 : vector<8x64xf32>
    %208 = vector.extract_strided_slice %207 {offsets = [0, 32], sizes = [8, 32], strides = [1, 1]} : vector<8x64xf32> to vector<8x32xf32>
    %c56_53 = arith.constant 56 : index
    %c32_54 = arith.constant 32 : index
    %209 = vector.load %arg10[%c56_53, %c32_54] : memref<64x64xf32, #tpu.memory_space<vmem>>, vector<8x32xf32>
    tpu.vector_store %arg10[%c56_53, %c32_54], %208 {strides = array<i32>} : memref<64x64xf32, #tpu.memory_space<vmem>>, vector<8x32xf32>,
    %c0_55 = arith.constant 0 : index
    %c0_56 = arith.constant 0 : index
    %210 = vector.load %arg0[%c0_55, %c0_56] : memref<64x128xf32, #tpu.memory_space<vmem>>, vector<64x128xf32>
    %c0_57 = arith.constant 0 : index
    %c0_58 = arith.constant 0 : index
    %211 = vector.load %arg4[%c0_57, %c0_58] : memref<128x128xf32, #tpu.memory_space<vmem>>, vector<128x128xf32>
    %cst_59 = arith.constant dense<0.000000e+00> : vector<64x128xf32>
    %212 = tpu.matmul %210, %211, %cst_59 {dimension_numbers = #tpu.dot_dimension_numbers<[1], [0], [0], [1], [0, 0, 1, 1], [], []>} : vector<64x128xf32>, vector<128x128xf32>, vector<64x128xf32> -> vector<64x128xf32>
    %c0_60 = arith.constant 0 : index
    %c0_61 = arith.constant 0 : index
    %213 = vector.load %arg10[%c0_60, %c0_61] : memref<64x64xf32, #tpu.memory_space<vmem>>, vector<64x64xf32>
    %c0_62 = arith.constant 0 : index
    %c0_63 = arith.constant 0 : index
    %214 = vector.load %arg5[%c0_62, %c0_63] : memref<64x128xf32, #tpu.memory_space<vmem>>, vector<64x128xf32>
    %cst_64 = arith.constant dense<0.000000e+00> : vector<64x128xf32>
    %215 = tpu.matmul %213, %214, %cst_64 {dimension_numbers = #tpu.dot_dimension_numbers<[1], [0], [0], [1], [0, 0, 1, 1], [], []>} : vector<64x64xf32>, vector<64x128xf32>, vector<64x128xf32> -> vector<64x128xf32>
    %216 = arith.addf %212, %215 : vector<64x128xf32>
    %c0_65 = arith.constant 0 : index
    %c0_66 = arith.constant 0 : index
    %217 = vector.load %arg6[%c0_65, %c0_66] : memref<1x128xf32, #tpu.memory_space<vmem>>, vector<1x128xf32>
    %218 = vector.broadcast %217 : vector<1x128xf32> to vector<64x128xf32>
    %219 = arith.addf %216, %218 : vector<64x128xf32>
    %220 = vector.shape_cast %219 : vector<64x128xf32> to vector<8x8x128xf32>
    %cst_67 = arith.constant dense<0xFF800000> : vector<8x128xf32>
    %221 = vector.multi_reduction <maximumf>, %220, %cst_67 [0] : vector<8x8x128xf32> to vector<8x128xf32>
    %222 = vector.shape_cast %221 : vector<8x128xf32> to vector<1x8x128xf32>
    %223 = vector.broadcast %222 : vector<1x8x128xf32> to vector<8x8x128xf32>
    %224 = arith.subf %220, %223 : vector<8x8x128xf32>
    %225 = math.exp %224 : vector<8x8x128xf32>
    %cst_68 = arith.constant dense<0.000000e+00> : vector<8x128xf32>
    %226 = vector.multi_reduction <add>, %225, %cst_68 [0] : vector<8x8x128xf32> to vector<8x128xf32>
    %227 = vector.shape_cast %226 : vector<8x128xf32> to vector<1x8x128xf32>
    %228 = vector.broadcast %227 : vector<1x8x128xf32> to vector<8x8x128xf32>
    %229 = arith.divf %225, %228 : vector<8x8x128xf32>
    %230 = vector.shape_cast %229 : vector<8x8x128xf32> to vector<64x128xf32>
    %c0_69 = arith.constant 0 : index
    %c0_70 = arith.constant 0 : index
    %231 = vector.load %arg7[%c0_69, %c0_70] : memref<128x128xf32, #tpu.memory_space<vmem>>, vector<128x128xf32>
    %cst_71 = arith.constant dense<0.000000e+00> : vector<64x128xf32>
    %232 = tpu.matmul %230, %231, %cst_71 {dimension_numbers = #tpu.dot_dimension_numbers<[1], [0], [0], [1], [0, 0, 1, 1], [], []>} : vector<64x128xf32>, vector<128x128xf32>, vector<64x128xf32> -> vector<64x128xf32>
    %c0_72 = arith.constant 0 : index
    %c0_73 = arith.constant 0 : index
    %233 = vector.load %arg8[%c0_72, %c0_73] : memref<1x128xf32, #tpu.memory_space<vmem>>, vector<1x128xf32>
    %234 = vector.broadcast %233 : vector<1x128xf32> to vector<64x128xf32>
    %235 = arith.addf %232, %234 : vector<64x128xf32>
    %236 = vector.shape_cast %235 : vector<64x128xf32> to vector<8x8x128xf32>
    %cst_74 = arith.constant dense<0xFF800000> : vector<8x8xf32>
    %237 = vector.multi_reduction <maximumf>, %236, %cst_74 [2] : vector<8x8x128xf32> to vector<8x8xf32>
    %238 = vector.shape_cast %237 : vector<8x8xf32> to vector<8x8x1xf32>
    %239 = vector.broadcast %238 : vector<8x8x1xf32> to vector<8x8x128xf32>
    %240 = arith.subf %236, %239 : vector<8x8x128xf32>
    %241 = math.exp %240 : vector<8x8x128xf32>
    %cst_75 = arith.constant dense<0.000000e+00> : vector<8x8xf32>
    %242 = vector.multi_reduction <add>, %241, %cst_75 [2] : vector<8x8x128xf32> to vector<8x8xf32>
    %243 = vector.shape_cast %242 : vector<8x8xf32> to vector<8x8x1xf32>
    %244 = vector.broadcast %243 : vector<8x8x1xf32> to vector<8x8x128xf32>
    %245 = arith.divf %241, %244 : vector<8x8x128xf32>
    %246 = tpu.iota {dimensions = array<i32: 1>} : vector<8x8x128xi32>
    %c2_i32 = arith.constant 2 : i32
    %247 = vector.broadcast %c2_i32 : i32 to vector<8x8x128xi32>
    %248 = arith.cmpi slt, %246, %247 : vector<8x8x128xi32>
    %cst_76 = arith.constant -1.000000e+00 : f32
    %249 = vector.broadcast %cst_76 : f32 to vector<8x8x128xf32>
    %250 = arith.select %248, %245, %249 : vector<8x8x128xi1>, vector<8x8x128xf32>
    %cst_77 = arith.constant dense<0xFF800000> : vector<8x128xf32>
    %251 = vector.multi_reduction <maximumf>, %250, %cst_77 [1] : vector<8x8x128xf32> to vector<8x128xf32>
    %252 = vector.shape_cast %251 : vector<8x128xf32> to vector<8x1x128xf32>
    %253 = vector.broadcast %252 : vector<8x1x128xf32> to vector<8x8x128xf32>
    %254 = arith.cmpf oeq, %250, %253 : vector<8x8x128xf32>
    %c8_i32 = arith.constant 8 : i32
    %255 = vector.broadcast %c8_i32 : i32 to vector<8x8x128xi32>
    %256 = arith.select %254, %246, %255 : vector<8x8x128xi1>, vector<8x8x128xi32>
    %cst_78 = arith.constant dense<2147483647> : vector<8x128xi32>
    %257 = vector.multi_reduction <minsi>, %256, %cst_78 [1] : vector<8x8x128xi32> to vector<8x128xi32>
    %258 = arith.sitofp %257 : vector<8x128xi32> to vector<8x128xf32>
    %c0_79 = arith.constant 0 : index
    %c0_80 = arith.constant 0 : index
    %259 = vector.load %arg9[%c0_79, %c0_80] : memref<8x128xf32, #tpu.memory_space<vmem>>, vector<8x128xf32>
    tpu.vector_store %arg9[%c0_79, %c0_80], %258 {strides = array<i32>} : memref<8x128xf32, #tpu.memory_space<vmem>>, vector<8x128xf32>,
    return
  }
}

</mosaic_0001>

<llo_original>
// kernel: tpu_custom_call.1
$region0: #{tpu_custom_call.1}
  #allocation0 [shape = 'u32[]', space=smem, size = 0x4, offset = 0x4, fixed_abs, tag = 'smem constant byte address 0x4 - core index']
  #allocation1 [shape = 'u32[144,128]{1,0:T(1,128)}', space=vmem, size = 0x12000, scoped, tag = 'internal scratch']
  #allocation2 [shape = 'f32[64,64]{1,0:T(8,128)}', space=vmem, size = 0x8000, scoped, tag = 'scratch operand']
  %s0 = inlined_call_operand.hbm [shape: f32[64,128], index: 0, kind: input, shape index: {}]
  %s1 = inlined_call_operand.hbm [shape: f32[128,256], index: 1, kind: input, shape index: {}]
  %s2 = inlined_call_operand.hbm [shape: f32[64,256], index: 2, kind: input, shape index: {}]
  %s3 = inlined_call_operand.vmem [shape: f32[1,256], index: 3, kind: input, shape index: {}]
  %s4 = inlined_call_operand.hbm [shape: f32[128,128], index: 4, kind: input, shape index: {}]
  %s5 = inlined_call_operand.hbm [shape: f32[64,128], index: 5, kind: input, shape index: {}]
  %s6 = inlined_call_operand.vmem [shape: f32[1,128], index: 6, kind: input, shape index: {}]
  %s7 = inlined_call_operand.hbm [shape: f32[128,128], index: 7, kind: input, shape index: {}]
  %s8 = inlined_call_operand.vmem [shape: f32[1,128], index: 8, kind: input, shape index: {}]
  %s9 = inlined_call_operand.hbm [shape: f32[8,128], index: 9, kind: output, shape index: {}]
  %s10 = sld [smem:[#allocation0]]
  $region70: #{tpu_custom_call.1} parent=0
    _
  %s12 = ssub.s32 1, %s10
  %s13 = scalar_select 0, %s12, %s10
  $region1: #{tpu_custom_call.1} parent=0
    #allocation3 [shape = 'u8[32768]{0}', space=vmem, size = 0x8000, scoped, tag = 'input window, operand 0, single buffered']
    #allocation4 [shape = 's32[1]{0}', space=sflag, size = 0x4, scoped, tag = 'scoped memory for tpu_custom_call.1']
    #allocation5 [shape = 's32[1]{0}', space=sflag, size = 0x4, scoped, tag = 'scoped memory for tpu_custom_call.1']
    #allocation6 [shape = 'u8[131072]{0}', space=vmem, size = 0x20000, scoped, tag = 'input window, operand 1, single buffered']
    #allocation7 [shape = 's32[1]{0}', space=sflag, size = 0x4, scoped, tag = 'scoped memory for tpu_custom_call.1']
    #allocation8 [shape = 'u8[65536]{0}', space=vmem, size = 0x10000, scoped, tag = 'input window, operand 2, single buffered']
    #allocation9 [shape = 'u8[65536]{0}', space=vmem, size = 0x10000, scoped, tag = 'input window, operand 4, single buffered']
    #allocation10 [shape = 's32[1]{0}', space=sflag, size = 0x4, scoped, tag = 'scoped memory for tpu_custom_call.1']
    #allocation11 [shape = 'u8[32768]{0}', space=vmem, size = 0x8000, scoped, tag = 'input window, operand 5, single buffered']
    #allocation12 [shape = 'u8[65536]{0}', space=vmem, size = 0x10000, scoped, tag = 'input window, operand 7, single buffered']
    #allocation13 [shape = 's32[1]{0}', space=sflag, size = 0x4, scoped, tag = 'scoped memory for tpu_custom_call.1']
    #allocation14 [shape = 'u8[4096]{0}', space=vmem, size = 0x1000, scoped, tag = 'output window, operand 0, single buffered']
    %14 = vsyncpa [#allocation4], 0
    %15 = vsyncpa [#allocation7], 0
    %16 = vsyncpa [#allocation10], 0
    %17 = vsyncpa [#allocation13], 0
    %18 = vsyncpa [#allocation5], 0
    // Predicated region
    $region2: #{tpu_custom_call.1} parent=1 // pred_check
      _
    $region3: #{tpu_custom_call.1} parent=1 // pred_check_branch
      %20 = sbr.rel (0) target = $region5
    $region4: #{tpu_custom_call.1} parent=1 // pred_region
      %s22 = ssub.s32 1024, 1024
      %23 = vsyncadd [#allocation4], %s22
      %s24 = sshll.u32 [#allocation3], 4
      %s25 = int_to_ptr.vmem [resolvable:$true] %s24
      %30 = dma.hbm_to_vmem [thread:$0]  %s0, 1024, %s25, [#allocation4], 128, 128, 8
    $region5: #{tpu_custom_call.1} parent=1 // pred_fallthru
      _
    // Predicated region
    $region6: #{tpu_custom_call.1} parent=1 // pred_check
      _
    $region7: #{tpu_custom_call.1} parent=1 // pred_check_branch
      %32 = sbr.rel (0) target = $region9
    $region8: #{tpu_custom_call.1} parent=1 // pred_region
      %s34 = ssub.s32 4096, 4096
      %35 = vsyncadd [#allocation7], %s34
      %s36 = sshll.u32 [#allocation6], 4
      %s37 = int_to_ptr.vmem [resolvable:$true] %s36
      %42 = dma.hbm_to_vmem [thread:$0]  %s1, 4096, %s37, [#allocation7], 256, 256, 16
    $region9: #{tpu_custom_call.1} parent=1 // pred_fallthru
      _
    // Predicated region
    $region10: #{tpu_custom_call.1} parent=1 // pred_check
      _
    $region11: #{tpu_custom_call.1} parent=1 // pred_check_branch
      %44 = sbr.rel (0) target = $region13
    $region12: #{tpu_custom_call.1} parent=1 // pred_region
      %s46 = ssub.s32 2048, 2048
      %47 = vsyncadd [#allocation7], %s46
      %s48 = sshll.u32 [#allocation8], 4
      %s49 = int_to_ptr.vmem [resolvable:$true] %s48
      %54 = dma.hbm_to_vmem [thread:$0]  %s2, 2048, %s49, [#allocation7], 256, 256, 16
    $region13: #{tpu_custom_call.1} parent=1 // pred_fallthru
      _
    // Predicated region
    $region14: #{tpu_custom_call.1} parent=1 // pred_check
      _
    $region15: #{tpu_custom_call.1} parent=1 // pred_check_branch
      %56 = sbr.rel (0) target = $region17
    $region16: #{tpu_custom_call.1} parent=1 // pred_region
      _
    $region17: #{tpu_custom_call.1} parent=1 // pred_fallthru
      _
    // Predicated region
    $region18: #{tpu_custom_call.1} parent=1 // pred_check
      _
    $region19: #{tpu_custom_call.1} parent=1 // pred_check_branch
      %58 = sbr.rel (0) target = $region21
    $region20: #{tpu_custom_call.1} parent=1 // pred_region
      %s60 = ssub.s32 2048, 2048
      %61 = vsyncadd [#allocation10], %s60
      %s62 = sshll.u32 [#allocation9], 4
      %s63 = int_to_ptr.vmem [resolvable:$true] %s62
      %68 = dma.hbm_to_vmem [thread:$0]  %s4, 2048, %s63, [#allocation10], 128, 128, 8
    $region21: #{tpu_custom_call.1} parent=1 // pred_fallthru
      _
    // Predicated region
    $region22: #{tpu_custom_call.1} parent=1 // pred_check
      _
    $region23: #{tpu_custom_call.1} parent=1 // pred_check_branch
      %70 = sbr.rel (0) target = $region25
    $region24: #{tpu_custom_call.1} parent=1 // pred_region
      %s72 = ssub.s32 1024, 1024
      %73 = vsyncadd [#allocation10], %s72
      %s74 = sshll.u32 [#allocation11], 4
      %s75 = int_to_ptr.vmem [resolvable:$true] %s74
      %80 = dma.hbm_to_vmem [thread:$0]  %s5, 1024, %s75, [#allocation10], 128, 128, 8
    $region25: #{tpu_custom_call.1} parent=1 // pred_fallthru
      _
    // Predicated region
    $region26: #{tpu_custom_call.1} parent=1 // pred_check
      _
    $region27: #{tpu_custom_call.1} parent=1 // pred_check_branch
      %82 = sbr.rel (0) target = $region29
    $region28: #{tpu_custom_call.1} parent=1 // pred_region
      _
    $region29: #{tpu_custom_call.1} parent=1 // pred_fallthru
      _
    // Predicated region
    $region30: #{tpu_custom_call.1} parent=1 // pred_check
      _
    $region31: #{tpu_custom_call.1} parent=1 // pred_check_branch
      %84 = sbr.rel (0) target = $region33
    $region32: #{tpu_custom_call.1} parent=1 // pred_region
      %s86 = ssub.s32 2048, 2048
      %87 = vsyncadd [#allocation13], %s86
      %s88 = sshll.u32 [#allocation12], 4
      %s89 = int_to_ptr.vmem [resolvable:$true] %s88
      %94 = dma.hbm_to_vmem [thread:$0]  %s7, 2048, %s89, [#allocation13], 128, 128, 8
    $region33: #{tpu_custom_call.1} parent=1 // pred_fallthru
      _
    // Predicated region
    $region34: #{tpu_custom_call.1} parent=1 // pred_check
      _
    $region35: #{tpu_custom_call.1} parent=1 // pred_check_branch
      %96 = sbr.rel (0) target = $region37
    $region36: #{tpu_custom_call.1} parent=1 // pred_region
      _
    $region37: #{tpu_custom_call.1} parent=1 // pred_fallthru
      _
    // Predicated region
    $region38: #{tpu_custom_call.1} parent=1 // pred_check
      _
    $region39: #{tpu_custom_call.1} parent=1 // pred_check_branch
      %98 = sbr.rel (0) target = $region41
    $region40: #{tpu_custom_call.1} parent=1 // pred_region
      %99 = dma.done [#allocation4], 1024
    $region41: #{tpu_custom_call.1} parent=1 // pred_fallthru
      _
    // Predicated region
    $region42: #{tpu_custom_call.1} parent=1 // pred_check
      _
    $region43: #{tpu_custom_call.1} parent=1 // pred_check_branch
      %101 = sbr.rel (0) target = $region45
    $region44: #{tpu_custom_call.1} parent=1 // pred_region
      %102 = dma.done [#allocation7], 4096
    $region45: #{tpu_custom_call.1} parent=1 // pred_fallthru
      _
    // Predicated region
    $region46: #{tpu_custom_call.1} parent=1 // pred_check
      _
    $region47: #{tpu_custom_call.1} parent=1 // pred_check_branch
      %104 = sbr.rel (0) target = $region49
    $region48: #{tpu_custom_call.1} parent=1 // pred_region
      %105 = dma.done [#allocation7], 2048
    $region49: #{tpu_custom_call.1} parent=1 // pred_fallthru
      _
    // Predicated region
    $region50: #{tpu_custom_call.1} parent=1 // pred_check
      _
    $region51: #{tpu_custom_call.1} parent=1 // pred_check_branch
      %107 = sbr.rel (0) target = $region53
    $region52: #{tpu_custom_call.1} parent=1 // pred_region
      %108 = dma.done [#allocation10], 2048
    $region53: #{tpu_custom_call.1} parent=1 // pred_fallthru
      _
    // Predicated region
    $region54: #{tpu_custom_call.1} parent=1 // pred_check
      _
    $region55: #{tpu_custom_call.1} parent=1 // pred_check_branch
      %110 = sbr.rel (0) target = $region57
    $region56: #{tpu_custom_call.1} parent=1 // pred_region
      %111 = dma.done [#allocation10], 1024
    $region57: #{tpu_custom_call.1} parent=1 // pred_fallthru
      _
    // Predicated region
    $region58: #{tpu_custom_call.1} parent=1 // pred_check
      _
    $region59: #{tpu_custom_call.1} parent=1 // pred_check_branch
      %113 = sbr.rel (0) target = $region61
    $region60: #{tpu_custom_call.1} parent=1 // pred_region
      %114 = dma.done [#allocation13], 2048
    $region61: #{tpu_custom_call.1} parent=1 // pred_fallthru
      _
    %v115 = vld [vmem:[#allocation3] sm:$0xff]
    %v116 = vld [vmem:[#allocation3 + $0x8] sm:$0xff]
    %v117 = vld [vmem:[#allocation3 + $0x10] sm:$0xff]
    %v118 = vld [vmem:[#allocation3 + $0x18] sm:$0xff]
    %v119 = vld [vmem:[#allocation3 + $0x20] sm:$0xff]
    %v120 = vld [vmem:[#allocation3 + $0x28] sm:$0xff]
    %v121 = vld [vmem:[#allocation3 + $0x30] sm:$0xff]
    %v122 = vld [vmem:[#allocation3 + $0x38] sm:$0xff]
    %v123 = vld [vmem:[#allocation6] sm:$0xff]
    %v124 = vld [vmem:[#allocation6 + $0x8] sm:$0xff]
    %v125 = vld [vmem:[#allocation6 + $0x10] sm:$0xff]
    %v126 = vld [vmem:[#allocation6 + $0x18] sm:$0xff]
    %v127 = vld [vmem:[#allocation6 + $0x20] sm:$0xff]
    %v128 = vld [vmem:[#allocation6 + $0x28] sm:$0xff]
    %v129 = vld [vmem:[#allocation6 + $0x30] sm:$0xff]
    %v130 = vld [vmem:[#allocation6 + $0x38] sm:$0xff]
    %v131 = vld [vmem:[#allocation6 + $0x40] sm:$0xff]
    %v132 = vld [vmem:[#allocation6 + $0x48] sm:$0xff]
    %v133 = vld [vmem:[#allocation6 + $0x50] sm:$0xff]
    %v134 = vld [vmem:[#allocation6 + $0x58] sm:$0xff]
    %v135 = vld [vmem:[#allocation6 + $0x60] sm:$0xff]
    %v136 = vld [vmem:[#allocation6 + $0x68] sm:$0xff]
    %v137 = vld [vmem:[#allocation6 + $0x70] sm:$0xff]
    %v138 = vld [vmem:[#allocation6 + $0x78] sm:$0xff]
    %v139 = vld [vmem:[#allocation6 + $0x80] sm:$0xff]
    %v140 = vld [vmem:[#allocation6 + $0x88] sm:$0xff]
    %v141 = vld [vmem:[#allocation6 + $0x90] sm:$0xff]
    %v142 = vld [vmem:[#allocation6 + $0x98] sm:$0xff]
    %v143 = vld [vmem:[#allocation6 + $0xa0] sm:$0xff]
    %v144 = vld [vmem:[#allocation6 + $0xa8] sm:$0xff]
    %v145 = vld [vmem:[#allocation6 + $0xb0] sm:$0xff]
    %v146 = vld [vmem:[#allocation6 + $0xb8] sm:$0xff]
    %v147 = vld [vmem:[#allocation6 + $0xc0] sm:$0xff]
    %v148 = vld [vmem:[#allocation6 + $0xc8] sm:$0xff]
    %v149 = vld [vmem:[#allocation6 + $0xd0] sm:$0xff]
    %v150 = vld [vmem:[#allocation6 + $0xd8] sm:$0xff]
    %v151 = vld [vmem:[#allocation6 + $0xe0] sm:$0xff]
    %v152 = vld [vmem:[#allocation6 + $0xe8] sm:$0xff]
    %v153 = vld [vmem:[#allocation6 + $0xf0] sm:$0xff]
    %v154 = vld [vmem:[#allocation6 + $0xf8] sm:$0xff]
    %v155 = vld [vmem:[%s3] sm:$0x3]
    %v157 = vlaneseq
    %v158 = vshrl.u32 %v157, 7
    %v159 = vsub.s32 0, %v158
    %v160 = vrot.slane %v155, %v159
    %v161 = vlaneseq
    %v162 = vshrl.u32 %v161, 7
    %v163 = vsub.s32 1, %v162
    %v164 = vrot.slane %v155, %v163
    %167 = vmatprep.subr.mxu0 %v154
    %168 = vmatpush1.msra.mxu0 %v153
    %169 = vmatprep.subr.mxu0 %v152
    %170 = vmatpush1.msra.mxu0 %v151
    %171 = vmatprep.subr.mxu0 %v150
    %172 = vmatpush1.msra.mxu0 %v149
    %173 = vmatprep.subr.mxu0 %v148
    %174 = vmatpush1.msra.mxu0 %v147
    %175 = vmatprep.subr.mxu0 %v146
    %176 = vmatpush1.msra.mxu0 %v145
    %177 = vmatprep.subr.mxu0 %v144
    %178 = vmatpush1.msra.mxu0 %v143
    %179 = vmatprep.subr.mxu0 %v142
    %180 = vmatpush1.msra.mxu0 %v141
    %181 = vmatprep.subr.mxu0 %v140
    %182 = vmatpush1.msra.mxu0 %v139
    %183 = vmatprep.subr.mxu0 %v138
    %184 = vmatpush1.msra.mxu0 %v137
    %185 = vmatprep.subr.mxu0 %v136
    %186 = vmatpush1.msra.mxu0 %v135
    %187 = vmatprep.subr.mxu0 %v134
    %188 = vmatpush1.msra.mxu0 %v133
    %189 = vmatprep.subr.mxu0 %v132
    %190 = vmatpush1.msra.mxu0 %v131
    %191 = vmatprep.subr.mxu0 %v130
    %192 = vmatpush1.msra.mxu0 %v129
    %193 = vmatprep.subr.mxu0 %v128
    %194 = vmatpush1.msra.mxu0 %v127
    %195 = vmatprep.subr.mxu0 %v126
    %196 = vmatpush1.msra.mxu0 %v125
    %197 = vmatprep.subr.mxu0 %v124
    %198 = vmatpush1.msra.mxu0 %v123
    %199 = vmatprep.subr.mxu0 0.0
    %200 = vmatpush2.msra.mxu0 0.0
    %201 = vmatprep.subr.mxu0 0.0
    %202 = vmatpush2.msra.mxu0 0.0
    %203 = vmatprep.subr.mxu0 0.0
    %204 = vmatpush2.msra.mxu0 0.0
    %205 = vmatprep.subr.mxu0 0.0
    %206 = vmatpush2.msra.mxu0 0.0
    %207 = vmatprep.subr.mxu0 0.0
    %208 = vmatpush2.msra.mxu0 0.0
    %209 = vmatprep.subr.mxu0 0.0
    %210 = vmatpush2.msra.mxu0 0.0
    %211 = vmatprep.subr.mxu0 0.0
    %212 = vmatpush2.msra.mxu0 0.0
    %213 = vmatprep.subr.mxu0 0.0
    %214 = vmatpush2.msra.mxu0 0.0
    %215 = vmatprep.subr.mxu0 0.0
    %216 = vmatpush2.msra.mxu0 0.0
    %217 = vmatprep.subr.mxu0 0.0
    %218 = vmatpush2.msra.mxu0 0.0
    %219 = vmatprep.subr.mxu0 0.0
    %220 = vmatpush2.msra.mxu0 0.0
    %221 = vmatprep.subr.mxu0 0.0
    %222 = vmatpush2.msra.mxu0 0.0
    %223 = vmatprep.subr.mxu0 0.0
    %224 = vmatpush2.msra.mxu0 0.0
    %225 = vmatprep.subr.mxu0 0.0
    %226 = vmatpush2.msra.mxu0 0.0
    %227 = vmatprep.subr.mxu0 0.0
    %228 = vmatpush2.msra.mxu0 0.0
    %229 = vmatprep.subr.mxu0 0.0
    %230 = vmatpush2.msra.mxu0 0.0
    %231 = vmatprep.mubr.f32.mxu0 0.0
    %232 = vmatmul.mubr.f32.gmra.mxu0 %v115
    %v233 = vpop.f32.mrf.mxu0
    %v234 = vadd.f32 %v160, %v233
    %v235 = vpop.f32.mrf.mxu0
    %v236 = vadd.f32 %v164, %v235
    %237 = vmatprep.mubr.f32.mxu0 0.0
    %238 = vmatmul.mubr.f32.gmra.mxu0 %v116
    %v239 = vpop.f32.mrf.mxu0
    %v240 = vadd.f32 %v160, %v239
    %v241 = vpop.f32.mrf.mxu0
    %v242 = vadd.f32 %v164, %v241
    %243 = vmatprep.mubr.f32.mxu0 0.0
    %244 = vmatmul.mubr.f32.gmra.mxu0 %v117
    %v245 = vpop.f32.mrf.mxu0
    %v246 = vadd.f32 %v160, %v245
    %v247 = vpop.f32.mrf.mxu0
    %v248 = vadd.f32 %v164, %v247
    %249 = vmatprep.mubr.f32.mxu0 0.0
    %250 = vmatmul.mubr.f32.gmra.mxu0 %v118
    %v251 = vpop.f32.mrf.mxu0
    %v252 = vadd.f32 %v160, %v251
    %v253 = vpop.f32.mrf.mxu0
    %v254 = vadd.f32 %v164, %v253
    %255 = vmatprep.mubr.f32.mxu0 0.0
    %256 = vmatmul.mubr.f32.gmra.mxu0 %v119
    %v257 = vpop.f32.mrf.mxu0
    %v258 = vadd.f32 %v160, %v257
    %v259 = vpop.f32.mrf.mxu0
    %v260 = vadd.f32 %v164, %v259
    %261 = vmatprep.mubr.f32.mxu0 0.0
    %262 = vmatmul.mubr.f32.gmra.mxu0 %v120
    %v263 = vpop.f32.mrf.mxu0
    %v264 = vadd.f32 %v160, %v263
    %v265 = vpop.f32.mrf.mxu0
    %v266 = vadd.f32 %v164, %v265
    %267 = vmatprep.mubr.f32.mxu0 0.0
    %268 = vmatmul.mubr.f32.gmra.mxu0 %v121
    %v269 = vpop.f32.mrf.mxu0
    %v270 = vadd.f32 %v160, %v269
    %v271 = vpop.f32.mrf.mxu0
    %v272 = vadd.f32 %v164, %v271
    %273 = vmatprep.mubr.f32.mxu0 0.0
    %274 = vmatmul.mubr.f32.gmra.mxu0 %v122
    %v275 = vpop.f32.mrf.mxu0
    %v276 = vadd.f32 %v160, %v275
    %v277 = vpop.f32.mrf.mxu0
    %v278 = vadd.f32 %v164, %v277
    %279 = vdwg.mxu0
    %v280 = vld [vmem:[#allocation8] sm:$0xff]
    %v281 = vld [vmem:[#allocation8 + $0x8] sm:$0xff]
    %v282 = vld [vmem:[#allocation8 + $0x10] sm:$0xff]
    %v283 = vld [vmem:[#allocation8 + $0x18] sm:$0xff]
    %v284 = vld [vmem:[#allocation8 + $0x20] sm:$0xff]
    %v285 = vld [vmem:[#allocation8 + $0x28] sm:$0xff]
    %v286 = vld [vmem:[#allocation8 + $0x30] sm:$0xff]
    %v287 = vld [vmem:[#allocation8 + $0x38] sm:$0xff]
    %v288 = vld [vmem:[#allocation8 + $0x40] sm:$0xff]
    %v289 = vld [vmem:[#allocation8 + $0x48] sm:$0xff]
    %v290 = vld [vmem:[#allocation8 + $0x50] sm:$0xff]
    %v291 = vld [vmem:[#allocation8 + $0x58] sm:$0xff]
    %v292 = vld [vmem:[#allocation8 + $0x60] sm:$0xff]
    %v293 = vld [vmem:[#allocation8 + $0x68] sm:$0xff]
    %v294 = vld [vmem:[#allocation8 + $0x70] sm:$0xff]
    %v295 = vld [vmem:[#allocation8 + $0x78] sm:$0xff]
    %v296 = vlaneseq
    %v297 = vand.u32 %v296, 127
    %vm298 = vcmp.lt.s32.totalorder %v297, 32
    %vm299 = vcmask 523264
    %v301 = vsel %vm299, 0.0, 0
    %303 = vmatprep.subr.mxu0 0.0
    %304 = vmatpush1.msra.mxu0 0.0
    %305 = vmatprep.subr.mxu0 0.0
    %306 = vmatpush1.msra.mxu0 0.0
    %307 = vmatprep.subr.mxu0 0.0
    %308 = vmatpush1.msra.mxu0 0.0
    %309 = vmatprep.subr.mxu0 0.0
    %310 = vmatpush1.msra.mxu0 0.0
    %311 = vmatprep.subr.mxu0 0.0
    %312 = vmatpush1.msra.mxu0 0.0
    %313 = vmatprep.subr.mxu0 0.0
    %314 = vmatpush1.msra.mxu0 0.0
    %315 = vmatprep.subr.mxu0 0.0
    %316 = vmatpush1.msra.mxu0 0.0
    %317 = vmatprep.subr.mxu0 0.0
    %318 = vmatpush1.msra.mxu0 0.0
    %319 = vmatprep.subr.mxu0 %v295
    %320 = vmatpush1.msra.mxu0 %v294
    %321 = vmatprep.subr.mxu0 %v293
    %322 = vmatpush1.msra.mxu0 %v292
    %323 = vmatprep.subr.mxu0 %v291
    %324 = vmatpush1.msra.mxu0 %v290
    %325 = vmatprep.subr.mxu0 %v289
    %326 = vmatpush1.msra.mxu0 %v288
    %327 = vmatprep.subr.mxu0 %v287
    %328 = vmatpush1.msra.mxu0 %v286
    %329 = vmatprep.subr.mxu0 %v285
    %330 = vmatpush1.msra.mxu0 %v284
    %331 = vmatprep.subr.mxu0 %v283
    %332 = vmatpush1.msra.mxu0 %v282
    %333 = vmatprep.subr.mxu0 %v281
    %334 = vmatpush1.msra.mxu0 %v280
    %335 = vmatprep.subr.mxu0 0.0
    %336 = vmatpush2.msra.mxu0 0.0
    %337 = vmatprep.subr.mxu0 0.0
    %338 = vmatpush2.msra.mxu0 0.0
    %339 = vmatprep.subr.mxu0 0.0
    %340 = vmatpush2.msra.mxu0 0.0
    %341 = vmatprep.subr.mxu0 0.0
    %342 = vmatpush2.msra.mxu0 0.0
    %343 = vmatprep.subr.mxu0 0.0
    %344 = vmatpush2.msra.mxu0 0.0
    %345 = vmatprep.subr.mxu0 0.0
    %346 = vmatpush2.msra.mxu0 0.0
    %347 = vmatprep.subr.mxu0 0.0
    %348 = vmatpush2.msra.mxu0 0.0
    %349 = vmatprep.subr.mxu0 0.0
    %350 = vmatpush2.msra.mxu0 0.0
    %351 = vmatprep.subr.mxu0 0.0
    %352 = vmatpush2.msra.mxu0 0.0
    %353 = vmatprep.subr.mxu0 0.0
    %354 = vmatpush2.msra.mxu0 0.0
    %355 = vmatprep.subr.mxu0 0.0
    %356 = vmatpush2.msra.mxu0 0.0
    %357 = vmatprep.subr.mxu0 0.0
    %358 = vmatpush2.msra.mxu0 0.0
    %359 = vmatprep.subr.mxu0 0.0
    %360 = vmatpush2.msra.mxu0 0.0
    %361 = vmatprep.subr.mxu0 0.0
    %362 = vmatpush2.msra.mxu0 0.0
    %363 = vmatprep.subr.mxu0 0.0
    %364 = vmatpush2.msra.mxu0 0.0
    %365 = vmatprep.subr.mxu0 0.0
    %366 = vmatpush2.msra.mxu0 0.0
    %367 = vmatprep.mubr.f32.mxu0 0.0
    %368 = vmatmul.mubr.f32.gmra.mxu0 %v301
    %v369 = vpop.f32.mrf.mxu0
    %v370 = vadd.f32 0.0, %v369
    %v371 = vpop.f32.mrf.mxu0
    %v372 = vadd.f32 0.0, %v371
    %373 = vdwg.mxu0
    %v374 = vadd.f32 %v234, %v370
    %v375 = vadd.f32 %v236, %v372
    %v376 = vxor.u32 %v374, 2147483648
    %v377 = vxor.u32 %v375, 2147483648
    %v378 = vmul.f32 %v376, 1.442695
    %v379 = vpow.pop %v378
    %v380 = vmul.f32 %v377, 1.442695
    %v381 = vpow.pop %v380
    %v382 = vadd.f32 %v379, 1.0
    %v383 = vadd.f32 %v381, 1.0
    %v384 = vrcp.pop %v382
    %v385 = vmul.f32 1.0, %v384
    %v386 = vrcp.pop %v383
    %v387 = vmul.f32 1.0, %v386
    %v388 = vtanh.pop %v375
    %v389 = vmul.f32 %v385, 0.0
    %v390 = vmul.f32 %v385, %v388
    %392 = vrot.lane.b32.xlu0 %v390, 64
    %v393 = vpop.permute.xlu0 %392
    %v395 = vadd.f32 %v389, %v393
    %v396 = vtanh.pop %v395
    %v397 = vmul.f32 %v387, %v396
    %399 = vrot.lane.b32.xlu0 %v397, 64
    %v400 = vpop.permute.xlu0 %399
    %v402 = vsel %vm298, %v400, 0.0
    %404 = vrot.lane.b32.xlu0 %v395, 64
    %v405 = vpop.permute.xlu0 %404
    %v407 = vsel %vm298, %v405, 0.0
    %vm408 = vcmask 261120
    %409 = vst.msk [vmem:[#allocation2] sm:$0xff] %vm408, %v402
    %v411 = vsel %vm299, %v402, 0
    %413 = vmatprep.subr.mxu0 0.0
    %414 = vmatpush1.msra.mxu0 0.0
    %415 = vmatprep.subr.mxu0 0.0
    %416 = vmatpush1.msra.mxu0 0.0
    %417 = vmatprep.subr.mxu0 0.0
    %418 = vmatpush1.msra.mxu0 0.0
    %419 = vmatprep.subr.mxu0 0.0
    %420 = vmatpush1.msra.mxu0 0.0
    %421 = vmatprep.subr.mxu0 0.0
    %422 = vmatpush1.msra.mxu0 0.0
    %423 = vmatprep.subr.mxu0 0.0
    %424 = vmatpush1.msra.mxu0 0.0
    %425 = vmatprep.subr.mxu0 0.0
    %426 = vmatpush1.msra.mxu0 0.0
    %427 = vmatprep.subr.mxu0 0.0
    %428 = vmatpush1.msra.mxu0 0.0
    %429 = vmatprep.subr.mxu0 %v295
    %430 = vmatpush1.msra.mxu0 %v294
    %431 = vmatprep.subr.mxu0 %v293
    %432 = vmatpush1.msra.mxu0 %v292
    %433 = vmatprep.subr.mxu0 %v291
    %434 = vmatpush1.msra.mxu0 %v290
    %435 = vmatprep.subr.mxu0 %v289
    %436 = vmatpush1.msra.mxu0 %v288
    %437 = vmatprep.subr.mxu0 %v287
    %438 = vmatpush1.msra.mxu0 %v286
    %439 = vmatprep.subr.mxu0 %v285
    %440 = vmatpush1.msra.mxu0 %v284
    %441 = vmatprep.subr.mxu0 %v283
    %442 = vmatpush1.msra.mxu0 %v282
    %443 = vmatprep.subr.mxu0 %v281
    %444 = vmatpush1.msra.mxu0 %v280
    %445 = vmatprep.subr.mxu0 0.0
    %446 = vmatpush2.msra.mxu0 0.0
    %447 = vmatprep.subr.mxu0 0.0
    %448 = vmatpush2.msra.mxu0 0.0
    %449 = vmatprep.subr.mxu0 0.0
    %450 = vmatpush2.msra.mxu0 0.0
    %451 = vmatprep.subr.mxu0 0.0
    %452 = vmatpush2.msra.mxu0 0.0
    %453 = vmatprep.subr.mxu0 0.0
    %454 = vmatpush2.msra.mxu0 0.0
    %455 = vmatprep.subr.mxu0 0.0
    %456 = vmatpush2.msra.mxu0 0.0
    %457 = vmatprep.subr.mxu0 0.0
    %458 = vmatpush2.msra.mxu0 0.0
    %459 = vmatprep.subr.mxu0 0.0
    %460 = vmatpush2.msra.mxu0 0.0
    %461 = vmatprep.subr.mxu0 0.0
    %462 = vmatpush2.msra.mxu0 0.0
    %463 = vmatprep.subr.mxu0 0.0
    %464 = vmatpush2.msra.mxu0 0.0
    %465 = vmatprep.subr.mxu0 0.0
    %466 = vmatpush2.msra.mxu0 0.0
    %467 = vmatprep.subr.mxu0 0.0
    %468 = vmatpush2.msra.mxu0 0.0
    %469 = vmatprep.subr.mxu0 0.0
    %470 = vmatpush2.msra.mxu0 0.0
    %471 = vmatprep.subr.mxu0 0.0
    %472 = vmatpush2.msra.mxu0 0.0
    %473 = vmatprep.subr.mxu0 0.0
    %474 = vmatpush2.msra.mxu0 0.0
    %475 = vmatprep.subr.mxu0 0.0
    %476 = vmatpush2.msra.mxu0 0.0
    %477 = vmatprep.mubr.f32.mxu0 0.0
    %478 = vmatmul.mubr.f32.gmra.mxu0 %v411
    %v479 = vpop.f32.mrf.mxu0
    %v480 = vadd.f32 0.0, %v479
    %v481 = vpop.f32.mrf.mxu0
    %v482 = vadd.f32 0.0, %v481
    %483 = vdwg.mxu0
    %v484 = vadd.f32 %v240, %v480
    %v485 = vadd.f32 %v242, %v482
    %v486 = vxor.u32 %v484, 2147483648
    %v487 = vxor.u32 %v485, 2147483648
    %v488 = vmul.f32 %v486, 1.442695
    %v489 = vpow.pop %v488
    %v490 = vmul.f32 %v487, 1.442695
    %v491 = vpow.pop %v490
    %v492 = vadd.f32 %v489, 1.0
    %v493 = vadd.f32 %v491, 1.0
    %v494 = vrcp.pop %v492
    %v495 = vmul.f32 1.0, %v494
    %v496 = vrcp.pop %v493
    %v497 = vmul.f32 1.0, %v496
    %v498 = vtanh.pop %v485
    %500 = vrot.lane.b32.xlu0 %v407, 64
    %v501 = vpop.permute.xlu0 %500
    %v503 = vmul.f32 %v495, %v501
    %v504 = vmul.f32 %v495, %v498
    %506 = vrot.lane.b32.xlu0 %v504, 64
    %v507 = vpop.permute.xlu0 %506
    %v509 = vadd.f32 %v503, %v507
    %v510 = vtanh.pop %v509
    %v511 = vmul.f32 %v497, %v510
    %513 = vrot.lane.b32.xlu0 %v511, 64
    %v514 = vpop.permute.xlu0 %513
    %516 = vst.msk [vmem:[#allocation2 + $0x8] sm:$0xff] %vm408, %v514
    %vm517 = vcmask 523520
    %518 = vst.msk [vmem:[#allocation2] sm:$0xff] %vm517, %v514
    %v519 = vsel %vm299, %v514, 0
    %521 = vmatprep.subr.mxu0 0.0
    %522 = vmatpush1.msra.mxu0 0.0
    %523 = vmatprep.subr.mxu0 0.0
    %524 = vmatpush1.msra.mxu0 0.0
    %525 = vmatprep.subr.mxu0 0.0
    %526 = vmatpush1.msra.mxu0 0.0
    %527 = vmatprep.subr.mxu0 0.0
    %528 = vmatpush1.msra.mxu0 0.0
    %529 = vmatprep.subr.mxu0 0.0
    %530 = vmatpush1.msra.mxu0 0.0
    %531 = vmatprep.subr.mxu0 0.0
    %532 = vmatpush1.msra.mxu0 0.0
    %533 = vmatprep.subr.mxu0 0.0
    %534 = vmatpush1.msra.mxu0 0.0
    %535 = vmatprep.subr.mxu0 0.0
    %536 = vmatpush1.msra.mxu0 0.0
    %537 = vmatprep.subr.mxu0 %v295
    %538 = vmatpush1.msra.mxu0 %v294
    %539 = vmatprep.subr.mxu0 %v293
    %540 = vmatpush1.msra.mxu0 %v292
    %541 = vmatprep.subr.mxu0 %v291
    %542 = vmatpush1.msra.mxu0 %v290
    %543 = vmatprep.subr.mxu0 %v289
    %544 = vmatpush1.msra.mxu0 %v288
    %545 = vmatprep.subr.mxu0 %v287
    %546 = vmatpush1.msra.mxu0 %v286
    %547 = vmatprep.subr.mxu0 %v285
    %548 = vmatpush1.msra.mxu0 %v284
    %549 = vmatprep.subr.mxu0 %v283
    %550 = vmatpush1.msra.mxu0 %v282
    %551 = vmatprep.subr.mxu0 %v281
    %552 = vmatpush1.msra.mxu0 %v280
    %553 = vmatprep.subr.mxu0 0.0
    %554 = vmatpush2.msra.mxu0 0.0
    %555 = vmatprep.subr.mxu0 0.0
    %556 = vmatpush2.msra.mxu0 0.0
    %557 = vmatprep.subr.mxu0 0.0
    %558 = vmatpush2.msra.mxu0 0.0
    %559 = vmatprep.subr.mxu0 0.0
    %560 = vmatpush2.msra.mxu0 0.0
    %561 = vmatprep.subr.mxu0 0.0
    %562 = vmatpush2.msra.mxu0 0.0
    %563 = vmatprep.subr.mxu0 0.0
    %564 = vmatpush2.msra.mxu0 0.0
    %565 = vmatprep.subr.mxu0 0.0
    %566 = vmatpush2.msra.mxu0 0.0
    %567 = vmatprep.subr.mxu0 0.0
    %568 = vmatpush2.msra.mxu0 0.0
    %569 = vmatprep.subr.mxu0 0.0
    %570 = vmatpush2.msra.mxu0 0.0
    %571 = vmatprep.subr.mxu0 0.0
    %572 = vmatpush2.msra.mxu0 0.0
    %573 = vmatprep.subr.mxu0 0.0
    %574 = vmatpush2.msra.mxu0 0.0
    %575 = vmatprep.subr.mxu0 0.0
    %576 = vmatpush2.msra.mxu0 0.0
    %577 = vmatprep.subr.mxu0 0.0
    %578 = vmatpush2.msra.mxu0 0.0
    %579 = vmatprep.subr.mxu0 0.0
    %580 = vmatpush2.msra.mxu0 0.0
    %581 = vmatprep.subr.mxu0 0.0
    %582 = vmatpush2.msra.mxu0 0.0
    %583 = vmatprep.subr.mxu0 0.0
    %584 = vmatpush2.msra.mxu0 0.0
    %585 = vmatprep.mubr.f32.mxu0 0.0
    %586 = vmatmul.mubr.f32.gmra.mxu0 %v519
    %v587 = vpop.f32.mrf.mxu0
    %v588 = vadd.f32 0.0, %v587
    %v589 = vpop.f32.mrf.mxu0
    %v590 = vadd.f32 0.0, %v589
    %591 = vdwg.mxu0
    %v592 = vadd.f32 %v246, %v588
    %v593 = vadd.f32 %v248, %v590
    %v594 = vxor.u32 %v592, 2147483648
    %v595 = vxor.u32 %v593, 2147483648
    %v596 = vmul.f32 %v594, 1.442695
    %v597 = vpow.pop %v596
    %v598 = vmul.f32 %v595, 1.442695
    %v599 = vpow.pop %v598
    %v600 = vadd.f32 %v597, 1.0
    %v601 = vadd.f32 %v599, 1.0
    %v602 = vrcp.pop %v600
    %v603 = vmul.f32 1.0, %v602
    %v604 = vrcp.pop %v601
    %v605 = vmul.f32 1.0, %v604
    %v606 = vtanh.pop %v593
    %v607 = vmul.f32 %v603, %v509
    %v608 = vmul.f32 %v603, %v606
    %610 = vrot.lane.b32.xlu0 %v608, 64
    %v611 = vpop.permute.xlu0 %610
    %v613 = vadd.f32 %v607, %v611
    %v614 = vtanh.pop %v613
    %v615 = vmul.f32 %v605, %v614
    %617 = vrot.lane.b32.xlu0 %v615, 64
    %v618 = vpop.permute.xlu0 %617
    %620 = vst.msk [vmem:[#allocation2 + $0x10] sm:$0xff] %vm408, %v618
    %621 = vst.msk [vmem:[#allocation2 + $0x8] sm:$0xff] %vm517, %v618
    %v622 = vsel %vm299, %v618, 0
    %624 = vmatprep.subr.mxu0 0.0
    %625 = vmatpush1.msra.mxu0 0.0
    %626 = vmatprep.subr.mxu0 0.0
    %627 = vmatpush1.msra.mxu0 0.0
    %628 = vmatprep.subr.mxu0 0.0
    %629 = vmatpush1.msra.mxu0 0.0
    %630 = vmatprep.subr.mxu0 0.0
    %631 = vmatpush1.msra.mxu0 0.0
    %632 = vmatprep.subr.mxu0 0.0
    %633 = vmatpush1.msra.mxu0 0.0
    %634 = vmatprep.subr.mxu0 0.0
    %635 = vmatpush1.msra.mxu0 0.0
    %636 = vmatprep.subr.mxu0 0.0
    %637 = vmatpush1.msra.mxu0 0.0
    %638 = vmatprep.subr.mxu0 0.0
    %639 = vmatpush1.msra.mxu0 0.0
    %640 = vmatprep.subr.mxu0 %v295
    %641 = vmatpush1.msra.mxu0 %v294
    %642 = vmatprep.subr.mxu0 %v293
    %643 = vmatpush1.msra.mxu0 %v292
    %644 = vmatprep.subr.mxu0 %v291
    %645 = vmatpush1.msra.mxu0 %v290
    %646 = vmatprep.subr.mxu0 %v289
    %647 = vmatpush1.msra.mxu0 %v288
    %648 = vmatprep.subr.mxu0 %v287
    %649 = vmatpush1.msra.mxu0 %v286
    %650 = vmatprep.subr.mxu0 %v285
    %651 = vmatpush1.msra.mxu0 %v284
    %652 = vmatprep.subr.mxu0 %v283
    %653 = vmatpush1.msra.mxu0 %v282
    %654 = vmatprep.subr.mxu0 %v281
    %655 = vmatpush1.msra.mxu0 %v280
    %656 = vmatprep.subr.mxu0 0.0
    %657 = vmatpush2.msra.mxu0 0.0
    %658 = vmatprep.subr.mxu0 0.0
    %659 = vmatpush2.msra.mxu0 0.0
    %660 = vmatprep.subr.mxu0 0.0
    %661 = vmatpush2.msra.mxu0 0.0
    %662 = vmatprep.subr.mxu0 0.0
    %663 = vmatpush2.msra.mxu0 0.0
    %664 = vmatprep.subr.mxu0 0.0
    %665 = vmatpush2.msra.mxu0 0.0
    %666 = vmatprep.subr.mxu0 0.0
    %667 = vmatpush2.msra.mxu0 0.0
    %668 = vmatprep.subr.mxu0 0.0
    %669 = vmatpush2.msra.mxu0 0.0
    %670 = vmatprep.subr.mxu0 0.0
    %671 = vmatpush2.msra.mxu0 0.0
    %672 = vmatprep.subr.mxu0 0.0
    %673 = vmatpush2.msra.mxu0 0.0
    %674 = vmatprep.subr.mxu0 0.0
    %675 = vmatpush2.msra.mxu0 0.0
    %676 = vmatprep.subr.mxu0 0.0
    %677 = vmatpush2.msra.mxu0 0.0
    %678 = vmatprep.subr.mxu0 0.0
    %679 = vmatpush2.msra.mxu0 0.0
    %680 = vmatprep.subr.mxu0 0.0
    %681 = vmatpush2.msra.mxu0 0.0
    %682 = vmatprep.subr.mxu0 0.0
    %683 = vmatpush2.msra.mxu0 0.0
    %684 = vmatprep.subr.mxu0 0.0
    %685 = vmatpush2.msra.mxu0 0.0
    %686 = vmatprep.subr.mxu0 0.0
    %687 = vmatpush2.msra.mxu0 0.0
    %688 = vmatprep.mubr.f32.mxu0 0.0
    %689 = vmatmul.mubr.f32.gmra.mxu0 %v622
    %v690 = vpop.f32.mrf.mxu0
    %v691 = vadd.f32 0.0, %v690
    %v692 = vpop.f32.mrf.mxu0
    %v693 = vadd.f32 0.0, %v692
    %694 = vdwg.mxu0
    %v695 = vadd.f32 %v252, %v691
    %v696 = vadd.f32 %v254, %v693
    %v697 = vxor.u32 %v695, 2147483648
    %v698 = vxor.u32 %v696, 2147483648
    %v699 = vmul.f32 %v697, 1.442695
    %v700 = vpow.pop %v699
    %v701 = vmul.f32 %v698, 1.442695
    %v702 = vpow.pop %v701
    %v703 = vadd.f32 %v700, 1.0
    %v704 = vadd.f32 %v702, 1.0
    %v705 = vrcp.pop %v703
    %v706 = vmul.f32 1.0, %v705
    %v707 = vrcp.pop %v704
    %v708 = vmul.f32 1.0, %v707
    %v709 = vtanh.pop %v696
    %v710 = vmul.f32 %v706, %v613
    %v711 = vmul.f32 %v706, %v709
    %713 = vrot.lane.b32.xlu0 %v711, 64
    %v714 = vpop.permute.xlu0 %713
    %v716 = vadd.f32 %v710, %v714
    %v717 = vtanh.pop %v716
    %v718 = vmul.f32 %v708, %v717
    %720 = vrot.lane.b32.xlu0 %v718, 64
    %v721 = vpop.permute.xlu0 %720
    %723 = vst.msk [vmem:[#allocation2 + $0x18] sm:$0xff] %vm408, %v721
    %724 = vst.msk [vmem:[#allocation2 + $0x10] sm:$0xff] %vm517, %v721
    %v725 = vsel %vm299, %v721, 0
    %727 = vmatprep.subr.mxu0 0.0
    %728 = vmatpush1.msra.mxu0 0.0
    %729 = vmatprep.subr.mxu0 0.0
    %730 = vmatpush1.msra.mxu0 0.0
    %731 = vmatprep.subr.mxu0 0.0
    %732 = vmatpush1.msra.mxu0 0.0
    %733 = vmatprep.subr.mxu0 0.0
    %734 = vmatpush1.msra.mxu0 0.0
    %735 = vmatprep.subr.mxu0 0.0
    %736 = vmatpush1.msra.mxu0 0.0
    %737 = vmatprep.subr.mxu0 0.0
    %738 = vmatpush1.msra.mxu0 0.0
    %739 = vmatprep.subr.mxu0 0.0
    %740 = vmatpush1.msra.mxu0 0.0
    %741 = vmatprep.subr.mxu0 0.0
    %742 = vmatpush1.msra.mxu0 0.0
    %743 = vmatprep.subr.mxu0 %v295
    %744 = vmatpush1.msra.mxu0 %v294
    %745 = vmatprep.subr.mxu0 %v293
    %746 = vmatpush1.msra.mxu0 %v292
    %747 = vmatprep.subr.mxu0 %v291
    %748 = vmatpush1.msra.mxu0 %v290
    %749 = vmatprep.subr.mxu0 %v289
    %750 = vmatpush1.msra.mxu0 %v288
    %751 = vmatprep.subr.mxu0 %v287
    %752 = vmatpush1.msra.mxu0 %v286
    %753 = vmatprep.subr.mxu0 %v285
    %754 = vmatpush1.msra.mxu0 %v284
    %755 = vmatprep.subr.mxu0 %v283
    %756 = vmatpush1.msra.mxu0 %v282
    %757 = vmatprep.subr.mxu0 %v281
    %758 = vmatpush1.msra.mxu0 %v280
    %759 = vmatprep.subr.mxu0 0.0
    %760 = vmatpush2.msra.mxu0 0.0
    %761 = vmatprep.subr.mxu0 0.0
    %762 = vmatpush2.msra.mxu0 0.0
    %763 = vmatprep.subr.mxu0 0.0
    %764 = vmatpush2.msra.mxu0 0.0
    %765 = vmatprep.subr.mxu0 0.0
    %766 = vmatpush2.msra.mxu0 0.0
    %767 = vmatprep.subr.mxu0 0.0
    %768 = vmatpush2.msra.mxu0 0.0
    %769 = vmatprep.subr.mxu0 0.0
    %770 = vmatpush2.msra.mxu0 0.0
    %771 = vmatprep.subr.mxu0 0.0
    %772 = vmatpush2.msra.mxu0 0.0
    %773 = vmatprep.subr.mxu0 0.0
    %774 = vmatpush2.msra.mxu0 0.0
    %775 = vmatprep.subr.mxu0 0.0
    %776 = vmatpush2.msra.mxu0 0.0
    %777 = vmatprep.subr.mxu0 0.0
    %778 = vmatpush2.msra.mxu0 0.0
    %779 = vmatprep.subr.mxu0 0.0
    %780 = vmatpush2.msra.mxu0 0.0
    %781 = vmatprep.subr.mxu0 0.0
    %782 = vmatpush2.msra.mxu0 0.0
    %783 = vmatprep.subr.mxu0 0.0
    %784 = vmatpush2.msra.mxu0 0.0
    %785 = vmatprep.subr.mxu0 0.0
    %786 = vmatpush2.msra.mxu0 0.0
    %787 = vmatprep.subr.mxu0 0.0
    %788 = vmatpush2.msra.mxu0 0.0
    %789 = vmatprep.subr.mxu0 0.0
    %790 = vmatpush2.msra.mxu0 0.0
    %791 = vmatprep.mubr.f32.mxu0 0.0
    %792 = vmatmul.mubr.f32.gmra.mxu0 %v725
    %v793 = vpop.f32.mrf.mxu0
    %v794 = vadd.f32 0.0, %v793
    %v795 = vpop.f32.mrf.mxu0
    %v796 = vadd.f32 0.0, %v795
    %797 = vdwg.mxu0
    %v798 = vadd.f32 %v258, %v794
    %v799 = vadd.f32 %v260, %v796
    %v800 = vxor.u32 %v798, 2147483648
    %v801 = vxor.u32 %v799, 2147483648
    %v802 = vmul.f32 %v800, 1.442695
    %v803 = vpow.pop %v802
    %v804 = vmul.f32 %v801, 1.442695
    %v805 = vpow.pop %v804
    %v806 = vadd.f32 %v803, 1.0
    %v807 = vadd.f32 %v805, 1.0
    %v808 = vrcp.pop %v806
    %v809 = vmul.f32 1.0, %v808
    %v810 = vrcp.pop %v807
    %v811 = vmul.f32 1.0, %v810
    %v812 = vtanh.pop %v799
    %v813 = vmul.f32 %v809, %v716
    %v814 = vmul.f32 %v809, %v812
    %816 = vrot.lane.b32.xlu0 %v814, 64
    %v817 = vpop.permute.xlu0 %816
    %v819 = vadd.f32 %v813, %v817
    %v820 = vtanh.pop %v819
    %v821 = vmul.f32 %v811, %v820
    %823 = vrot.lane.b32.xlu0 %v821, 64
    %v824 = vpop.permute.xlu0 %823
    %826 = vst.msk [vmem:[#allocation2 + $0x20] sm:$0xff] %vm408, %v824
    %827 = vst.msk [vmem:[#allocation2 + $0x18] sm:$0xff] %vm517, %v824
    %v828 = vsel %vm299, %v824, 0
    %830 = vmatprep.subr.mxu0 0.0
    %831 = vmatpush1.msra.mxu0 0.0
    %832 = vmatprep.subr.mxu0 0.0
    %833 = vmatpush1.msra.mxu0 0.0
    %834 = vmatprep.subr.mxu0 0.0
    %835 = vmatpush1.msra.mxu0 0.0
    %836 = vmatprep.subr.mxu0 0.0
    %837 = vmatpush1.msra.mxu0 0.0
    %838 = vmatprep.subr.mxu0 0.0
    %839 = vmatpush1.msra.mxu0 0.0
    %840 = vmatprep.subr.mxu0 0.0
    %841 = vmatpush1.msra.mxu0 0.0
    %842 = vmatprep.subr.mxu0 0.0
    %843 = vmatpush1.msra.mxu0 0.0
    %844 = vmatprep.subr.mxu0 0.0
    %845 = vmatpush1.msra.mxu0 0.0
    %846 = vmatprep.subr.mxu0 %v295
    %847 = vmatpush1.msra.mxu0 %v294
    %848 = vmatprep.subr.mxu0 %v293
    %849 = vmatpush1.msra.mxu0 %v292
    %850 = vmatprep.subr.mxu0 %v291
    %851 = vmatpush1.msra.mxu0 %v290
    %852 = vmatprep.subr.mxu0 %v289
    %853 = vmatpush1.msra.mxu0 %v288
    %854 = vmatprep.subr.mxu0 %v287
    %855 = vmatpush1.msra.mxu0 %v286
    %856 = vmatprep.subr.mxu0 %v285
    %857 = vmatpush1.msra.mxu0 %v284
    %858 = vmatprep.subr.mxu0 %v283
    %859 = vmatpush1.msra.mxu0 %v282
    %860 = vmatprep.subr.mxu0 %v281
    %861 = vmatpush1.msra.mxu0 %v280
    %862 = vmatprep.subr.mxu0 0.0
    %863 = vmatpush2.msra.mxu0 0.0
    %864 = vmatprep.subr.mxu0 0.0
    %865 = vmatpush2.msra.mxu0 0.0
    %866 = vmatprep.subr.mxu0 0.0
    %867 = vmatpush2.msra.mxu0 0.0
    %868 = vmatprep.subr.mxu0 0.0
    %869 = vmatpush2.msra.mxu0 0.0
    %870 = vmatprep.subr.mxu0 0.0
    %871 = vmatpush2.msra.mxu0 0.0
    %872 = vmatprep.subr.mxu0 0.0
    %873 = vmatpush2.msra.mxu0 0.0
    %874 = vmatprep.subr.mxu0 0.0
    %875 = vmatpush2.msra.mxu0 0.0
    %876 = vmatprep.subr.mxu0 0.0
    %877 = vmatpush2.msra.mxu0 0.0
    %878 = vmatprep.subr.mxu0 0.0
    %879 = vmatpush2.msra.mxu0 0.0
    %880 = vmatprep.subr.mxu0 0.0
    %881 = vmatpush2.msra.mxu0 0.0
    %882 = vmatprep.subr.mxu0 0.0
    %883 = vmatpush2.msra.mxu0 0.0
    %884 = vmatprep.subr.mxu0 0.0
    %885 = vmatpush2.msra.mxu0 0.0
    %886 = vmatprep.subr.mxu0 0.0
    %887 = vmatpush2.msra.mxu0 0.0
    %888 = vmatprep.subr.mxu0 0.0
    %889 = vmatpush2.msra.mxu0 0.0
    %890 = vmatprep.subr.mxu0 0.0
    %891 = vmatpush2.msra.mxu0 0.0
    %892 = vmatprep.subr.mxu0 0.0
    %893 = vmatpush2.msra.mxu0 0.0
    %894 = vmatprep.mubr.f32.mxu0 0.0
    %895 = vmatmul.mubr.f32.gmra.mxu0 %v828
    %v896 = vpop.f32.mrf.mxu0
    %v897 = vadd.f32 0.0, %v896
    %v898 = vpop.f32.mrf.mxu0
    %v899 = vadd.f32 0.0, %v898
    %900 = vdwg.mxu0
    %v901 = vadd.f32 %v264, %v897
    %v902 = vadd.f32 %v266, %v899
    %v903 = vxor.u32 %v901, 2147483648
    %v904 = vxor.u32 %v902, 2147483648
    %v905 = vmul.f32 %v903, 1.442695
    %v906 = vpow.pop %v905
    %v907 = vmul.f32 %v904, 1.442695
    %v908 = vpow.pop %v907
    %v909 = vadd.f32 %v906, 1.0
    %v910 = vadd.f32 %v908, 1.0
    %v911 = vrcp.pop %v909
    %v912 = vmul.f32 1.0, %v911
    %v913 = vrcp.pop %v910
    %v914 = vmul.f32 1.0, %v913
    %v915 = vtanh.pop %v902
    %v916 = vmul.f32 %v912, %v819
    %v917 = vmul.f32 %v912, %v915
    %919 = vrot.lane.b32.xlu0 %v917, 64
    %v920 = vpop.permute.xlu0 %919
    %v922 = vadd.f32 %v916, %v920
    %v923 = vtanh.pop %v922
    %v924 = vmul.f32 %v914, %v923
    %926 = vrot.lane.b32.xlu0 %v924, 64
    %v927 = vpop.permute.xlu0 %926
    %929 = vst.msk [vmem:[#allocation2 + $0x28] sm:$0xff] %vm408, %v927
    %930 = vst.msk [vmem:[#allocation2 + $0x20] sm:$0xff] %vm517, %v927
    %v931 = vsel %vm299, %v927, 0
    %933 = vmatprep.subr.mxu0 0.0
    %934 = vmatpush1.msra.mxu0 0.0
    %935 = vmatprep.subr.mxu0 0.0
    %936 = vmatpush1.msra.mxu0 0.0
    %937 = vmatprep.subr.mxu0 0.0
    %938 = vmatpush1.msra.mxu0 0.0
    %939 = vmatprep.subr.mxu0 0.0
    %940 = vmatpush1.msra.mxu0 0.0
    %941 = vmatprep.subr.mxu0 0.0
    %942 = vmatpush1.msra.mxu0 0.0
    %943 = vmatprep.subr.mxu0 0.0
    %944 = vmatpush1.msra.mxu0 0.0
    %945 = vmatprep.subr.mxu0 0.0
    %946 = vmatpush1.msra.mxu0 0.0
    %947 = vmatprep.subr.mxu0 0.0
    %948 = vmatpush1.msra.mxu0 0.0
    %949 = vmatprep.subr.mxu0 %v295
    %950 = vmatpush1.msra.mxu0 %v294
    %951 = vmatprep.subr.mxu0 %v293
    %952 = vmatpush1.msra.mxu0 %v292
    %953 = vmatprep.subr.mxu0 %v291
    %954 = vmatpush1.msra.mxu0 %v290
    %955 = vmatprep.subr.mxu0 %v289
    %956 = vmatpush1.msra.mxu0 %v288
    %957 = vmatprep.subr.mxu0 %v287
    %958 = vmatpush1.msra.mxu0 %v286
    %959 = vmatprep.subr.mxu0 %v285
    %960 = vmatpush1.msra.mxu0 %v284
    %961 = vmatprep.subr.mxu0 %v283
    %962 = vmatpush1.msra.mxu0 %v282
    %963 = vmatprep.subr.mxu0 %v281
    %964 = vmatpush1.msra.mxu0 %v280
    %965 = vmatprep.subr.mxu0 0.0
    %966 = vmatpush2.msra.mxu0 0.0
    %967 = vmatprep.subr.mxu0 0.0
    %968 = vmatpush2.msra.mxu0 0.0
    %969 = vmatprep.subr.mxu0 0.0
    %970 = vmatpush2.msra.mxu0 0.0
    %971 = vmatprep.subr.mxu0 0.0
    %972 = vmatpush2.msra.mxu0 0.0
    %973 = vmatprep.subr.mxu0 0.0
    %974 = vmatpush2.msra.mxu0 0.0
    %975 = vmatprep.subr.mxu0 0.0
    %976 = vmatpush2.msra.mxu0 0.0
    %977 = vmatprep.subr.mxu0 0.0
    %978 = vmatpush2.msra.mxu0 0.0
    %979 = vmatprep.subr.mxu0 0.0
    %980 = vmatpush2.msra.mxu0 0.0
    %981 = vmatprep.subr.mxu0 0.0
    %982 = vmatpush2.msra.mxu0 0.0
    %983 = vmatprep.subr.mxu0 0.0
    %984 = vmatpush2.msra.mxu0 0.0
    %985 = vmatprep.subr.mxu0 0.0
    %986 = vmatpush2.msra.mxu0 0.0
    %987 = vmatprep.subr.mxu0 0.0
    %988 = vmatpush2.msra.mxu0 0.0
    %989 = vmatprep.subr.mxu0 0.0
    %990 = vmatpush2.msra.mxu0 0.0
    %991 = vmatprep.subr.mxu0 0.0
    %992 = vmatpush2.msra.mxu0 0.0
    %993 = vmatprep.subr.mxu0 0.0
    %994 = vmatpush2.msra.mxu0 0.0
    %995 = vmatprep.subr.mxu0 0.0
    %996 = vmatpush2.msra.mxu0 0.0
    %997 = vmatprep.mubr.f32.mxu0 0.0
    %998 = vmatmul.mubr.f32.gmra.mxu0 %v931
    %v999 = vpop.f32.mrf.mxu0
    %v1000 = vadd.f32 0.0, %v999
    %v1001 = vpop.f32.mrf.mxu0
    %v1002 = vadd.f32 0.0, %v1001
    %1003 = vdwg.mxu0
    %v1004 = vadd.f32 %v270, %v1000
    %v1005 = vadd.f32 %v272, %v1002
    %v1006 = vxor.u32 %v1004, 2147483648
    %v1007 = vxor.u32 %v1005, 2147483648
    %v1008 = vmul.f32 %v1006, 1.442695
    %v1009 = vpow.pop %v1008
    %v1010 = vmul.f32 %v1007, 1.442695
    %v1011 = vpow.pop %v1010
    %v1012 = vadd.f32 %v1009, 1.0
    %v1013 = vadd.f32 %v1011, 1.0
    %v1014 = vrcp.pop %v1012
    %v1015 = vmul.f32 1.0, %v1014
    %v1016 = vrcp.pop %v1013
    %v1017 = vmul.f32 1.0, %v1016
    %v1018 = vtanh.pop %v1005
    %v1019 = vmul.f32 %v1015, %v922
    %v1020 = vmul.f32 %v1015, %v1018
    %1022 = vrot.lane.b32.xlu0 %v1020, 64
    %v1023 = vpop.permute.xlu0 %1022
    %v1025 = vadd.f32 %v1019, %v1023
    %v1026 = vtanh.pop %v1025
    %v1027 = vmul.f32 %v1017, %v1026
    %1029 = vrot.lane.b32.xlu0 %v1027, 64
    %v1030 = vpop.permute.xlu0 %1029
    %1032 = vst.msk [vmem:[#allocation2 + $0x30] sm:$0xff] %vm408, %v1030
    %1033 = vst.msk [vmem:[#allocation2 + $0x28] sm:$0xff] %vm517, %v1030
    %v1034 = vsel %vm299, %v1030, 0
    %1036 = vmatprep.subr.mxu0 0.0
    %1037 = vmatpush1.msra.mxu0 0.0
    %1038 = vmatprep.subr.mxu0 0.0
    %1039 = vmatpush1.msra.mxu0 0.0
    %1040 = vmatprep.subr.mxu0 0.0
    %1041 = vmatpush1.msra.mxu0 0.0
    %1042 = vmatprep.subr.mxu0 0.0
    %1043 = vmatpush1.msra.mxu0 0.0
    %1044 = vmatprep.subr.mxu0 0.0
    %1045 = vmatpush1.msra.mxu0 0.0
    %1046 = vmatprep.subr.mxu0 0.0
    %1047 = vmatpush1.msra.mxu0 0.0
    %1048 = vmatprep.subr.mxu0 0.0
    %1049 = vmatpush1.msra.mxu0 0.0
    %1050 = vmatprep.subr.mxu0 0.0
    %1051 = vmatpush1.msra.mxu0 0.0
    %1052 = vmatprep.subr.mxu0 %v295
    %1053 = vmatpush1.msra.mxu0 %v294
    %1054 = vmatprep.subr.mxu0 %v293
    %1055 = vmatpush1.msra.mxu0 %v292
    %1056 = vmatprep.subr.mxu0 %v291
    %1057 = vmatpush1.msra.mxu0 %v290
    %1058 = vmatprep.subr.mxu0 %v289
    %1059 = vmatpush1.msra.mxu0 %v288
    %1060 = vmatprep.subr.mxu0 %v287
    %1061 = vmatpush1.msra.mxu0 %v286
    %1062 = vmatprep.subr.mxu0 %v285
    %1063 = vmatpush1.msra.mxu0 %v284
    %1064 = vmatprep.subr.mxu0 %v283
    %1065 = vmatpush1.msra.mxu0 %v282
    %1066 = vmatprep.subr.mxu0 %v281
    %1067 = vmatpush1.msra.mxu0 %v280
    %1068 = vmatprep.subr.mxu0 0.0
    %1069 = vmatpush2.msra.mxu0 0.0
    %1070 = vmatprep.subr.mxu0 0.0
    %1071 = vmatpush2.msra.mxu0 0.0
    %1072 = vmatprep.subr.mxu0 0.0
    %1073 = vmatpush2.msra.mxu0 0.0
    %1074 = vmatprep.subr.mxu0 0.0
    %1075 = vmatpush2.msra.mxu0 0.0
    %1076 = vmatprep.subr.mxu0 0.0
    %1077 = vmatpush2.msra.mxu0 0.0
    %1078 = vmatprep.subr.mxu0 0.0
    %1079 = vmatpush2.msra.mxu0 0.0
    %1080 = vmatprep.subr.mxu0 0.0
    %1081 = vmatpush2.msra.mxu0 0.0
    %1082 = vmatprep.subr.mxu0 0.0
    %1083 = vmatpush2.msra.mxu0 0.0
    %1084 = vmatprep.subr.mxu0 0.0
    %1085 = vmatpush2.msra.mxu0 0.0
    %1086 = vmatprep.subr.mxu0 0.0
    %1087 = vmatpush2.msra.mxu0 0.0
    %1088 = vmatprep.subr.mxu0 0.0
    %1089 = vmatpush2.msra.mxu0 0.0
    %1090 = vmatprep.subr.mxu0 0.0
    %1091 = vmatpush2.msra.mxu0 0.0
    %1092 = vmatprep.subr.mxu0 0.0
    %1093 = vmatpush2.msra.mxu0 0.0
    %1094 = vmatprep.subr.mxu0 0.0
    %1095 = vmatpush2.msra.mxu0 0.0
    %1096 = vmatprep.subr.mxu0 0.0
    %1097 = vmatpush2.msra.mxu0 0.0
    %1098 = vmatprep.subr.mxu0 0.0
    %1099 = vmatpush2.msra.mxu0 0.0
    %1100 = vmatprep.mubr.f32.mxu0 0.0
    %1101 = vmatmul.mubr.f32.gmra.mxu0 %v1034
    %v1102 = vpop.f32.mrf.mxu0
    %v1103 = vadd.f32 0.0, %v1102
    %v1104 = vpop.f32.mrf.mxu0
    %v1105 = vadd.f32 0.0, %v1104
    %1106 = vdwg.mxu0
    %v1107 = vadd.f32 %v276, %v1103
    %v1108 = vadd.f32 %v278, %v1105
    %v1109 = vxor.u32 %v1107, 2147483648
    %v1110 = vxor.u32 %v1108, 2147483648
    %v1111 = vmul.f32 %v1109, 1.442695
    %v1112 = vpow.pop %v1111
    %v1113 = vmul.f32 %v1110, 1.442695
    %v1114 = vpow.pop %v1113
    %v1115 = vadd.f32 %v1112, 1.0
    %v1116 = vadd.f32 %v1114, 1.0
    %v1117 = vrcp.pop %v1115
    %v1118 = vmul.f32 1.0, %v1117
    %v1119 = vrcp.pop %v1116
    %v1120 = vmul.f32 1.0, %v1119
    %v1121 = vtanh.pop %v1108
    %v1122 = vmul.f32 %v1118, %v1025
    %v1123 = vmul.f32 %v1118, %v1121
    %1125 = vrot.lane.b32.xlu0 %v1123, 64
    %v1126 = vpop.permute.xlu0 %1125
    %v1128 = vadd.f32 %v1122, %v1126
    %v1129 = vtanh.pop %v1128
    %v1130 = vmul.f32 %v1120, %v1129
    %1132 = vrot.lane.b32.xlu0 %v1130, 64
    %v1133 = vpop.permute.xlu0 %1132
    %1135 = vst.msk [vmem:[#allocation2 + $0x38] sm:$0xff] %vm408, %v1133
    %1136 = vst.msk [vmem:[#allocation2 + $0x30] sm:$0xff] %vm517, %v1133
    %v1137 = vld [vmem:[%s3] sm:$0x3]
    %v1138 = vsel %vm299, %v1133, 0
    %1140 = vmatprep.subr.mxu0 0.0
    %1141 = vmatpush1.msra.mxu0 0.0
    %1142 = vmatprep.subr.mxu0 0.0
    %1143 = vmatpush1.msra.mxu0 0.0
    %1144 = vmatprep.subr.mxu0 0.0
    %1145 = vmatpush1.msra.mxu0 0.0
    %1146 = vmatprep.subr.mxu0 0.0
    %1147 = vmatpush1.msra.mxu0 0.0
    %1148 = vmatprep.subr.mxu0 0.0
    %1149 = vmatpush1.msra.mxu0 0.0
    %1150 = vmatprep.subr.mxu0 0.0
    %1151 = vmatpush1.msra.mxu0 0.0
    %1152 = vmatprep.subr.mxu0 0.0
    %1153 = vmatpush1.msra.mxu0 0.0
    %1154 = vmatprep.subr.mxu0 0.0
    %1155 = vmatpush1.msra.mxu0 0.0
    %1156 = vmatprep.subr.mxu0 %v295
    %1157 = vmatpush1.msra.mxu0 %v294
    %1158 = vmatprep.subr.mxu0 %v293
    %1159 = vmatpush1.msra.mxu0 %v292
    %1160 = vmatprep.subr.mxu0 %v291
    %1161 = vmatpush1.msra.mxu0 %v290
    %1162 = vmatprep.subr.mxu0 %v289
    %1163 = vmatpush1.msra.mxu0 %v288
    %1164 = vmatprep.subr.mxu0 %v287
    %1165 = vmatpush1.msra.mxu0 %v286
    %1166 = vmatprep.subr.mxu0 %v285
    %1167 = vmatpush1.msra.mxu0 %v284
    %1168 = vmatprep.subr.mxu0 %v283
    %1169 = vmatpush1.msra.mxu0 %v282
    %1170 = vmatprep.subr.mxu0 %v281
    %1171 = vmatpush1.msra.mxu0 %v280
    %1172 = vmatprep.subr.mxu0 0.0
    %1173 = vmatpush2.msra.mxu0 0.0
    %1174 = vmatprep.subr.mxu0 0.0
    %1175 = vmatpush2.msra.mxu0 0.0
    %1176 = vmatprep.subr.mxu0 0.0
    %1177 = vmatpush2.msra.mxu0 0.0
    %1178 = vmatprep.subr.mxu0 0.0
    %1179 = vmatpush2.msra.mxu0 0.0
    %1180 = vmatprep.subr.mxu0 0.0
    %1181 = vmatpush2.msra.mxu0 0.0
    %1182 = vmatprep.subr.mxu0 0.0
    %1183 = vmatpush2.msra.mxu0 0.0
    %1184 = vmatprep.subr.mxu0 0.0
    %1185 = vmatpush2.msra.mxu0 0.0
    %1186 = vmatprep.subr.mxu0 0.0
    %1187 = vmatpush2.msra.mxu0 0.0
    %1188 = vmatprep.subr.mxu0 0.0
    %1189 = vmatpush2.msra.mxu0 0.0
    %1190 = vmatprep.subr.mxu0 0.0
    %1191 = vmatpush2.msra.mxu0 0.0
    %1192 = vmatprep.subr.mxu0 0.0
    %1193 = vmatpush2.msra.mxu0 0.0
    %1194 = vmatprep.subr.mxu0 0.0
    %1195 = vmatpush2.msra.mxu0 0.0
    %1196 = vmatprep.subr.mxu0 0.0
    %1197 = vmatpush2.msra.mxu0 0.0
    %1198 = vmatprep.subr.mxu0 0.0
    %1199 = vmatpush2.msra.mxu0 0.0
    %1200 = vmatprep.subr.mxu0 0.0
    %1201 = vmatpush2.msra.mxu0 0.0
    %1202 = vmatprep.subr.mxu0 0.0
    %1203 = vmatpush2.msra.mxu0 0.0
    %1204 = vmatprep.mubr.f32.mxu0 0.0
    %1205 = vmatmul.mubr.f32.gmra.mxu0 %v1138
    %v1206 = vpop.f32.mrf.mxu0
    %v1207 = vadd.f32 0.0, %v1206
    %v1208 = vpop.f32.mrf.mxu0
    %v1209 = vadd.f32 0.0, %v1208
    %1210 = vdwg.mxu0
    %v1212 = vlaneseq
    %v1213 = vshrl.u32 %v1212, 7
    %v1214 = vsub.s32 0, %v1213
    %v1215 = vrot.slane %v1137, %v1214
    %v1216 = vlaneseq
    %v1217 = vshrl.u32 %v1216, 7
    %v1218 = vsub.s32 1, %v1217
    %v1219 = vrot.slane %v1137, %v1218
    %v1222 = vadd.f32 %v1215, %v1207
    %v1223 = vadd.f32 %v1219, %v1209
    %v1224 = vxor.u32 %v1222, 2147483648
    %v1225 = vxor.u32 %v1223, 2147483648
    %v1226 = vmul.f32 %v1224, 1.442695
    %v1227 = vpow.pop %v1226
    %v1228 = vmul.f32 %v1225, 1.442695
    %v1229 = vpow.pop %v1228
    %v1230 = vadd.f32 %v1227, 1.0
    %v1231 = vadd.f32 %v1229, 1.0
    %v1232 = vrcp.pop %v1230
    %v1233 = vmul.f32 1.0, %v1232
    %v1234 = vrcp.pop %v1231
    %v1235 = vmul.f32 1.0, %v1234
    %v1236 = vtanh.pop %v1223
    %v1237 = vmul.f32 %v1233, %v1128
    %v1238 = vmul.f32 %v1233, %v1236
    %1240 = vrot.lane.b32.xlu0 %v1238, 64
    %v1241 = vpop.permute.xlu0 %1240
    %v1243 = vadd.f32 %v1237, %v1241
    %v1244 = vtanh.pop %v1243
    %v1245 = vmul.f32 %v1235, %v1244
    %1247 = vrot.lane.b32.xlu0 %v1245, 64
    %v1248 = vpop.permute.xlu0 %1247
    %1250 = vst.msk [vmem:[#allocation2 + $0x38] sm:$0xff] %vm517, %v1248
    %v1251 = vld [vmem:[#allocation3] sm:$0xff]
    %v1252 = vld [vmem:[#allocation3 + $0x8] sm:$0xff]
    %v1253 = vld [vmem:[#allocation3 + $0x10] sm:$0xff]
    %v1254 = vld [vmem:[#allocation3 + $0x18] sm:$0xff]
    %v1255 = vld [vmem:[#allocation3 + $0x20] sm:$0xff]
    %v1256 = vld [vmem:[#allocation3 + $0x28] sm:$0xff]
    %v1257 = vld [vmem:[#allocation3 + $0x30] sm:$0xff]
    %v1258 = vld [vmem:[#allocation3 + $0x38] sm:$0xff]
    %v1259 = vld [vmem:[#allocation9] sm:$0xff]
    %v1260 = vld [vmem:[#allocation9 + $0x8] sm:$0xff]
    %v1261 = vld [vmem:[#allocation9 + $0x10] sm:$0xff]
    %v1262 = vld [vmem:[#allocation9 + $0x18] sm:$0xff]
    %v1263 = vld [vmem:[#allocation9 + $0x20] sm:$0xff]
    %v1264 = vld [vmem:[#allocation9 + $0x28] sm:$0xff]
    %v1265 = vld [vmem:[#allocation9 + $0x30] sm:$0xff]
    %v1266 = vld [vmem:[#allocation9 + $0x38] sm:$0xff]
    %v1267 = vld [vmem:[#allocation9 + $0x40] sm:$0xff]
    %v1268 = vld [vmem:[#allocation9 + $0x48] sm:$0xff]
    %v1269 = vld [vmem:[#allocation9 + $0x50] sm:$0xff]
    %v1270 = vld [vmem:[#allocation9 + $0x58] sm:$0xff]
    %v1271 = vld [vmem:[#allocation9 + $0x60] sm:$0xff]
    %v1272 = vld [vmem:[#allocation9 + $0x68] sm:$0xff]
    %v1273 = vld [vmem:[#allocation9 + $0x70] sm:$0xff]
    %v1274 = vld [vmem:[#allocation9 + $0x78] sm:$0xff]
    %v1275 = vld [vmem:[#allocation2] sm:$0xff]
    %v1276 = vld [vmem:[#allocation2 + $0x8] sm:$0xff]
    %v1277 = vld [vmem:[#allocation2 + $0x10] sm:$0xff]
    %v1278 = vld [vmem:[#allocation2 + $0x18] sm:$0xff]
    %v1279 = vld [vmem:[#allocation2 + $0x20] sm:$0xff]
    %v1280 = vld [vmem:[#allocation2 + $0x28] sm:$0xff]
    %v1281 = vld [vmem:[#allocation2 + $0x30] sm:$0xff]
    %v1282 = vld [vmem:[#allocation2 + $0x38] sm:$0xff]
    %v1283 = vld [vmem:[#allocation11] sm:$0xff]
    %v1284 = vld [vmem:[#allocation11 + $0x8] sm:$0xff]
    %v1285 = vld [vmem:[#allocation11 + $0x10] sm:$0xff]
    %v1286 = vld [vmem:[#allocation11 + $0x18] sm:$0xff]
    %v1287 = vld [vmem:[#allocation11 + $0x20] sm:$0xff]
    %v1288 = vld [vmem:[#allocation11 + $0x28] sm:$0xff]
    %v1289 = vld [vmem:[#allocation11 + $0x30] sm:$0xff]
    %v1290 = vld [vmem:[#allocation11 + $0x38] sm:$0xff]
    %v1292 = vsel %vm299, %v1275, 0
    %v1295 = vsel %vm299, %v1276, 0
    %v1298 = vsel %vm299, %v1277, 0
    %v1301 = vsel %vm299, %v1278, 0
    %v1304 = vsel %vm299, %v1279, 0
    %v1307 = vsel %vm299, %v1280, 0
    %v1310 = vsel %vm299, %v1281, 0
    %v1313 = vsel %vm299, %v1282, 0
    %1315 = vmatprep.subr.mxu0 0.0
    %1316 = vmatpush1.msra.mxu0 0.0
    %1317 = vmatprep.subr.mxu0 0.0
    %1318 = vmatpush1.msra.mxu0 0.0
    %1319 = vmatprep.subr.mxu0 0.0
    %1320 = vmatpush1.msra.mxu0 0.0
    %1321 = vmatprep.subr.mxu0 0.0
    %1322 = vmatpush1.msra.mxu0 0.0
    %1323 = vmatprep.subr.mxu0 0.0
    %1324 = vmatpush1.msra.mxu0 0.0
    %1325 = vmatprep.subr.mxu0 0.0
    %1326 = vmatpush1.msra.mxu0 0.0
    %1327 = vmatprep.subr.mxu0 0.0
    %1328 = vmatpush1.msra.mxu0 0.0
    %1329 = vmatprep.subr.mxu0 0.0
    %1330 = vmatpush1.msra.mxu0 0.0
    %1331 = vmatprep.subr.mxu0 0.0
    %1332 = vmatpush1.msra.mxu0 %v1290
    %1333 = vmatprep.subr.mxu0 0.0
    %1334 = vmatpush1.msra.mxu0 %v1289
    %1335 = vmatprep.subr.mxu0 0.0
    %1336 = vmatpush1.msra.mxu0 %v1288
    %1337 = vmatprep.subr.mxu0 0.0
    %1338 = vmatpush1.msra.mxu0 %v1287
    %1339 = vmatprep.subr.mxu0 0.0
    %1340 = vmatpush1.msra.mxu0 %v1286
    %1341 = vmatprep.subr.mxu0 0.0
    %1342 = vmatpush1.msra.mxu0 %v1285
    %1343 = vmatprep.subr.mxu0 0.0
    %1344 = vmatpush1.msra.mxu0 %v1284
    %1345 = vmatprep.subr.mxu0 0.0
    %1346 = vmatpush1.msra.mxu0 %v1283
    %1347 = vmatprep.subr.mxu0 0.0
    %1348 = vmatpush2.msra.mxu0 0.0
    %1349 = vmatprep.subr.mxu0 0.0
    %1350 = vmatpush2.msra.mxu0 0.0
    %1351 = vmatprep.subr.mxu0 0.0
    %1352 = vmatpush2.msra.mxu0 0.0
    %1353 = vmatprep.subr.mxu0 0.0
    %1354 = vmatpush2.msra.mxu0 0.0
    %1355 = vmatprep.subr.mxu0 0.0
    %1356 = vmatpush2.msra.mxu0 0.0
    %1357 = vmatprep.subr.mxu0 0.0
    %1358 = vmatpush2.msra.mxu0 0.0
    %1359 = vmatprep.subr.mxu0 0.0
    %1360 = vmatpush2.msra.mxu0 0.0
    %1361 = vmatprep.subr.mxu0 0.0
    %1362 = vmatpush2.msra.mxu0 0.0
    %1363 = vmatprep.subr.mxu0 0.0
    %1364 = vmatpush2.msra.mxu0 0.0
    %1365 = vmatprep.subr.mxu0 0.0
    %1366 = vmatpush2.msra.mxu0 0.0
    %1367 = vmatprep.subr.mxu0 0.0
    %1368 = vmatpush2.msra.mxu0 0.0
    %1369 = vmatprep.subr.mxu0 0.0
    %1370 = vmatpush2.msra.mxu0 0.0
    %1371 = vmatprep.subr.mxu0 0.0
    %1372 = vmatpush2.msra.mxu0 0.0
    %1373 = vmatprep.subr.mxu0 0.0
    %1374 = vmatpush2.msra.mxu0 0.0
    %1375 = vmatprep.subr.mxu0 0.0
    %1376 = vmatpush2.msra.mxu0 0.0
    %1377 = vmatprep.subr.mxu0 0.0
    %1378 = vmatpush2.msra.mxu0 0.0
    %1379 = vmatprep.mubr.f32.mxu0 0.0
    %1380 = vmatmul.mubr.f32.gmra.mxu0 %v1292
    %v1381 = vpop.f32.mrf.mxu0
    %v1382 = vadd.f32 0.0, %v1381
    %v1383 = vpop.f32.mrf.mxu0
    %1384 = vmatprep.mubr.f32.mxu0 0.0
    %1385 = vmatmul.mubr.f32.gmra.mxu0 %v1295
    %v1386 = vpop.f32.mrf.mxu0
    %v1387 = vadd.f32 0.0, %v1386
    %v1388 = vpop.f32.mrf.mxu0
    %1389 = vmatprep.mubr.f32.mxu0 0.0
    %1390 = vmatmul.mubr.f32.gmra.mxu0 %v1298
    %v1391 = vpop.f32.mrf.mxu0
    %v1392 = vadd.f32 0.0, %v1391
    %v1393 = vpop.f32.mrf.mxu0
    %1394 = vmatprep.mubr.f32.mxu0 0.0
    %1395 = vmatmul.mubr.f32.gmra.mxu0 %v1301
    %v1396 = vpop.f32.mrf.mxu0
    %v1397 = vadd.f32 0.0, %v1396
    %v1398 = vpop.f32.mrf.mxu0
    %1399 = vmatprep.mubr.f32.mxu0 0.0
    %1400 = vmatmul.mubr.f32.gmra.mxu0 %v1304
    %v1401 = vpop.f32.mrf.mxu0
    %v1402 = vadd.f32 0.0, %v1401
    %v1403 = vpop.f32.mrf.mxu0
    %1404 = vmatprep.mubr.f32.mxu0 0.0
    %1405 = vmatmul.mubr.f32.gmra.mxu0 %v1307
    %v1406 = vpop.f32.mrf.mxu0
    %v1407 = vadd.f32 0.0, %v1406
    %v1408 = vpop.f32.mrf.mxu0
    %1409 = vmatprep.mubr.f32.mxu0 0.0
    %1410 = vmatmul.mubr.f32.gmra.mxu0 %v1310
    %v1411 = vpop.f32.mrf.mxu0
    %v1412 = vadd.f32 0.0, %v1411
    %v1413 = vpop.f32.mrf.mxu0
    %1414 = vmatprep.mubr.f32.mxu0 0.0
    %1415 = vmatmul.mubr.f32.gmra.mxu0 %v1313
    %v1416 = vpop.f32.mrf.mxu0
    %v1417 = vadd.f32 0.0, %v1416
    %v1418 = vpop.f32.mrf.mxu0
    %1419 = vdwg.mxu0
    %1420 = vmatprep.subr.mxu0 0.0
    %1421 = vmatpush1.msra.mxu0 %v1274
    %1422 = vmatprep.subr.mxu0 0.0
    %1423 = vmatpush1.msra.mxu0 %v1273
    %1424 = vmatprep.subr.mxu0 0.0
    %1425 = vmatpush1.msra.mxu0 %v1272
    %1426 = vmatprep.subr.mxu0 0.0
    %1427 = vmatpush1.msra.mxu0 %v1271
    %1428 = vmatprep.subr.mxu0 0.0
    %1429 = vmatpush1.msra.mxu0 %v1270
    %1430 = vmatprep.subr.mxu0 0.0
    %1431 = vmatpush1.msra.mxu0 %v1269
    %1432 = vmatprep.subr.mxu0 0.0
    %1433 = vmatpush1.msra.mxu0 %v1268
    %1434 = vmatprep.subr.mxu0 0.0
    %1435 = vmatpush1.msra.mxu0 %v1267
    %1436 = vmatprep.subr.mxu0 0.0
    %1437 = vmatpush1.msra.mxu0 %v1266
    %1438 = vmatprep.subr.mxu0 0.0
    %1439 = vmatpush1.msra.mxu0 %v1265
    %1440 = vmatprep.subr.mxu0 0.0
    %1441 = vmatpush1.msra.mxu0 %v1264
    %1442 = vmatprep.subr.mxu0 0.0
    %1443 = vmatpush1.msra.mxu0 %v1263
    %1444 = vmatprep.subr.mxu0 0.0
    %1445 = vmatpush1.msra.mxu0 %v1262
    %1446 = vmatprep.subr.mxu0 0.0
    %1447 = vmatpush1.msra.mxu0 %v1261
    %1448 = vmatprep.subr.mxu0 0.0
    %1449 = vmatpush1.msra.mxu0 %v1260
    %1450 = vmatprep.subr.mxu0 0.0
    %1451 = vmatpush1.msra.mxu0 %v1259
    %1452 = vmatprep.subr.mxu0 0.0
    %1453 = vmatpush2.msra.mxu0 0.0
    %1454 = vmatprep.subr.mxu0 0.0
    %1455 = vmatpush2.msra.mxu0 0.0
    %1456 = vmatprep.subr.mxu0 0.0
    %1457 = vmatpush2.msra.mxu0 0.0
    %1458 = vmatprep.subr.mxu0 0.0
    %1459 = vmatpush2.msra.mxu0 0.0
    %1460 = vmatprep.subr.mxu0 0.0
    %1461 = vmatpush2.msra.mxu0 0.0
    %1462 = vmatprep.subr.mxu0 0.0
    %1463 = vmatpush2.msra.mxu0 0.0
    %1464 = vmatprep.subr.mxu0 0.0
    %1465 = vmatpush2.msra.mxu0 0.0
    %1466 = vmatprep.subr.mxu0 0.0
    %1467 = vmatpush2.msra.mxu0 0.0
    %1468 = vmatprep.subr.mxu0 0.0
    %1469 = vmatpush2.msra.mxu0 0.0
    %1470 = vmatprep.subr.mxu0 0.0
    %1471 = vmatpush2.msra.mxu0 0.0
    %1472 = vmatprep.subr.mxu0 0.0
    %1473 = vmatpush2.msra.mxu0 0.0
    %1474 = vmatprep.subr.mxu0 0.0
    %1475 = vmatpush2.msra.mxu0 0.0
    %1476 = vmatprep.subr.mxu0 0.0
    %1477 = vmatpush2.msra.mxu0 0.0
    %1478 = vmatprep.subr.mxu0 0.0
    %1479 = vmatpush2.msra.mxu0 0.0
    %1480 = vmatprep.subr.mxu0 0.0
    %1481 = vmatpush2.msra.mxu0 0.0
    %1482 = vmatprep.subr.mxu0 0.0
    %1483 = vmatpush2.msra.mxu0 0.0
    %1484 = vmatprep.mubr.f32.mxu0 0.0
    %1485 = vmatmul.mubr.f32.gmra.mxu0 %v1251
    %v1486 = vpop.f32.mrf.mxu0
    %v1487 = vadd.f32 %v1382, %v1486
    %v1488 = vpop.f32.mrf.mxu0
    %1489 = vmatprep.mubr.f32.mxu0 0.0
    %1490 = vmatmul.mubr.f32.gmra.mxu0 %v1252
    %v1491 = vpop.f32.mrf.mxu0
    %v1492 = vadd.f32 %v1387, %v1491
    %v1493 = vpop.f32.mrf.mxu0
    %1494 = vmatprep.mubr.f32.mxu0 0.0
    %1495 = vmatmul.mubr.f32.gmra.mxu0 %v1253
    %v1496 = vpop.f32.mrf.mxu0
    %v1497 = vadd.f32 %v1392, %v1496
    %v1498 = vpop.f32.mrf.mxu0
    %1499 = vmatprep.mubr.f32.mxu0 0.0
    %1500 = vmatmul.mubr.f32.gmra.mxu0 %v1254
    %v1501 = vpop.f32.mrf.mxu0
    %v1502 = vadd.f32 %v1397, %v1501
    %v1503 = vpop.f32.mrf.mxu0
    %1504 = vmatprep.mubr.f32.mxu0 0.0
    %1505 = vmatmul.mubr.f32.gmra.mxu0 %v1255
    %v1506 = vpop.f32.mrf.mxu0
    %v1507 = vadd.f32 %v1402, %v1506
    %v1508 = vpop.f32.mrf.mxu0
    %1509 = vmatprep.mubr.f32.mxu0 0.0
    %1510 = vmatmul.mubr.f32.gmra.mxu0 %v1256
    %v1511 = vpop.f32.mrf.mxu0
    %v1512 = vadd.f32 %v1407, %v1511
    %v1513 = vpop.f32.mrf.mxu0
    %1514 = vmatprep.mubr.f32.mxu0 0.0
    %1515 = vmatmul.mubr.f32.gmra.mxu0 %v1257
    %v1516 = vpop.f32.mrf.mxu0
    %v1517 = vadd.f32 %v1412, %v1516
    %v1518 = vpop.f32.mrf.mxu0
    %1519 = vmatprep.mubr.f32.mxu0 0.0
    %1520 = vmatmul.mubr.f32.gmra.mxu0 %v1258
    %v1521 = vpop.f32.mrf.mxu0
    %v1522 = vadd.f32 %v1417, %v1521
    %v1523 = vpop.f32.mrf.mxu0
    %1524 = vdwg.mxu0
    %v1525 = vld [vmem:[%s6] sm:$0x1]
    %v1527 = vlaneseq
    %v1528 = vshrl.u32 %v1527, 7
    %v1529 = vsub.s32 0, %v1528
    %v1530 = vrot.slane %v1525, %v1529
    %v1532 = vadd.f32 %v1487, %v1530
    %v1533 = vadd.f32 %v1492, %v1530
    %v1534 = vadd.f32 %v1497, %v1530
    %v1535 = vadd.f32 %v1502, %v1530
    %v1536 = vadd.f32 %v1507, %v1530
    %v1537 = vadd.f32 %v1512, %v1530
    %v1538 = vadd.f32 %v1517, %v1530
    %v1539 = vadd.f32 %v1522, %v1530
    %v1540 = vmax.f32 %v1532, %v1536
    %v1541 = vmax.f32 %v1533, %v1537
    %v1542 = vmax.f32 %v1534, %v1538
    %v1543 = vmax.f32 %v1535, %v1539
    %v1544 = vmax.f32 %v1540, %v1541
    %v1545 = vmax.f32 %v1542, %v1543
    %v1546 = vmax.f32 %v1544, %v1545
    %v1547 = vsub.f32 %v1532, %v1546
    %v1548 = vsub.f32 %v1533, %v1546
    %v1549 = vsub.f32 %v1534, %v1546
    %v1550 = vsub.f32 %v1535, %v1546
    %v1551 = vsub.f32 %v1536, %v1546
    %v1552 = vsub.f32 %v1537, %v1546
    %v1553 = vsub.f32 %v1538, %v1546
    %v1554 = vsub.f32 %v1539, %v1546
    %v1555 = vmul.f32 %v1547, 1.442695
    %v1556 = vpow.pop %v1555
    %v1557 = vmul.f32 %v1548, 1.442695
    %v1558 = vpow.pop %v1557
    %v1559 = vmul.f32 %v1549, 1.442695
    %v1560 = vpow.pop %v1559
    %v1561 = vmul.f32 %v1550, 1.442695
    %v1562 = vpow.pop %v1561
    %v1563 = vmul.f32 %v1551, 1.442695
    %v1564 = vpow.pop %v1563
    %v1565 = vmul.f32 %v1552, 1.442695
    %v1566 = vpow.pop %v1565
    %v1567 = vmul.f32 %v1553, 1.442695
    %v1568 = vpow.pop %v1567
    %v1569 = vmul.f32 %v1554, 1.442695
    %v1570 = vpow.pop %v1569
    %v1571 = vadd.f32 %v1556, %v1558
    %v1572 = vadd.f32 %v1571, %v1560
    %v1573 = vadd.f32 %v1572, %v1562
    %v1574 = vadd.f32 %v1573, %v1564
    %v1575 = vadd.f32 %v1574, %v1566
    %v1576 = vadd.f32 %v1575, %v1568
    %v1577 = vadd.f32 %v1576, %v1570
    %v1578 = vrcp.pop %v1577
    %v1579 = vmul.f32 %v1556, %v1578
    %v1580 = vmul.f32 %v1558, %v1578
    %v1581 = vmul.f32 %v1560, %v1578
    %v1582 = vmul.f32 %v1562, %v1578
    %v1583 = vmul.f32 %v1564, %v1578
    %v1584 = vmul.f32 %v1566, %v1578
    %v1585 = vmul.f32 %v1568, %v1578
    %v1586 = vmul.f32 %v1570, %v1578
    %v1587 = vld [vmem:[#allocation12] sm:$0xff]
    %v1588 = vld [vmem:[#allocation12 + $0x8] sm:$0xff]
    %v1589 = vld [vmem:[#allocation12 + $0x10] sm:$0xff]
    %v1590 = vld [vmem:[#allocation12 + $0x18] sm:$0xff]
    %v1591 = vld [vmem:[#allocation12 + $0x20] sm:$0xff]
    %v1592 = vld [vmem:[#allocation12 + $0x28] sm:$0xff]
    %v1593 = vld [vmem:[#allocation12 + $0x30] sm:$0xff]
    %v1594 = vld [vmem:[#allocation12 + $0x38] sm:$0xff]
    %v1595 = vld [vmem:[#allocation12 + $0x40] sm:$0xff]
    %v1596 = vld [vmem:[#allocation12 + $0x48] sm:$0xff]
    %v1597 = vld [vmem:[#allocation12 + $0x50] sm:$0xff]
    %v1598 = vld [vmem:[#allocation12 + $0x58] sm:$0xff]
    %v1599 = vld [vmem:[#allocation12 + $0x60] sm:$0xff]
    %v1600 = vld [vmem:[#allocation12 + $0x68] sm:$0xff]
    %v1601 = vld [vmem:[#allocation12 + $0x70] sm:$0xff]
    %v1602 = vld [vmem:[#allocation12 + $0x78] sm:$0xff]
    %v1603 = vld [vmem:[%s8] sm:$0x1]
    %v1605 = vlaneseq
    %v1606 = vshrl.u32 %v1605, 7
    %v1607 = vsub.s32 0, %v1606
    %v1608 = vrot.slane %v1603, %v1607
    %1610 = vmatprep.subr.mxu0 0.0
    %1611 = vmatpush1.msra.mxu0 %v1602
    %1612 = vmatprep.subr.mxu0 0.0
    %1613 = vmatpush1.msra.mxu0 %v1601
    %1614 = vmatprep.subr.mxu0 0.0
    %1615 = vmatpush1.msra.mxu0 %v1600
    %1616 = vmatprep.subr.mxu0 0.0
    %1617 = vmatpush1.msra.mxu0 %v1599
    %1618 = vmatprep.subr.mxu0 0.0
    %1619 = vmatpush1.msra.mxu0 %v1598
    %1620 = vmatprep.subr.mxu0 0.0
    %1621 = vmatpush1.msra.mxu0 %v1597
    %1622 = vmatprep.subr.mxu0 0.0
    %1623 = vmatpush1.msra.mxu0 %v1596
    %1624 = vmatprep.subr.mxu0 0.0
    %1625 = vmatpush1.msra.mxu0 %v1595
    %1626 = vmatprep.subr.mxu0 0.0
    %1627 = vmatpush1.msra.mxu0 %v1594
    %1628 = vmatprep.subr.mxu0 0.0
    %1629 = vmatpush1.msra.mxu0 %v1593
    %1630 = vmatprep.subr.mxu0 0.0
    %1631 = vmatpush1.msra.mxu0 %v1592
    %1632 = vmatprep.subr.mxu0 0.0
    %1633 = vmatpush1.msra.mxu0 %v1591
    %1634 = vmatprep.subr.mxu0 0.0
    %1635 = vmatpush1.msra.mxu0 %v1590
    %1636 = vmatprep.subr.mxu0 0.0
    %1637 = vmatpush1.msra.mxu0 %v1589
    %1638 = vmatprep.subr.mxu0 0.0
    %1639 = vmatpush1.msra.mxu0 %v1588
    %1640 = vmatprep.subr.mxu0 0.0
    %1641 = vmatpush1.msra.mxu0 %v1587
    %1642 = vmatprep.subr.mxu0 0.0
    %1643 = vmatpush2.msra.mxu0 0.0
    %1644 = vmatprep.subr.mxu0 0.0
    %1645 = vmatpush2.msra.mxu0 0.0
    %1646 = vmatprep.subr.mxu0 0.0
    %1647 = vmatpush2.msra.mxu0 0.0
    %1648 = vmatprep.subr.mxu0 0.0
    %1649 = vmatpush2.msra.mxu0 0.0
    %1650 = vmatprep.subr.mxu0 0.0
    %1651 = vmatpush2.msra.mxu0 0.0
    %1652 = vmatprep.subr.mxu0 0.0
    %1653 = vmatpush2.msra.mxu0 0.0
    %1654 = vmatprep.subr.mxu0 0.0
    %1655 = vmatpush2.msra.mxu0 0.0
    %1656 = vmatprep.subr.mxu0 0.0
    %1657 = vmatpush2.msra.mxu0 0.0
    %1658 = vmatprep.subr.mxu0 0.0
    %1659 = vmatpush2.msra.mxu0 0.0
    %1660 = vmatprep.subr.mxu0 0.0
    %1661 = vmatpush2.msra.mxu0 0.0
    %1662 = vmatprep.subr.mxu0 0.0
    %1663 = vmatpush2.msra.mxu0 0.0
    %1664 = vmatprep.subr.mxu0 0.0
    %1665 = vmatpush2.msra.mxu0 0.0
    %1666 = vmatprep.subr.mxu0 0.0
    %1667 = vmatpush2.msra.mxu0 0.0
    %1668 = vmatprep.subr.mxu0 0.0
    %1669 = vmatpush2.msra.mxu0 0.0
    %1670 = vmatprep.subr.mxu0 0.0
    %1671 = vmatpush2.msra.mxu0 0.0
    %1672 = vmatprep.subr.mxu0 0.0
    %1673 = vmatpush2.msra.mxu0 0.0
    %1674 = vmatprep.mubr.f32.mxu0 0.0
    %1675 = vmatmul.mubr.f32.gmra.mxu0 %v1579
    %v1676 = vpop.f32.mrf.mxu0
    %v1677 = vadd.f32 %v1608, %v1676
    %v1678 = vpop.f32.mrf.mxu0
    %1679 = vmatprep.mubr.f32.mxu0 0.0
    %1680 = vmatmul.mubr.f32.gmra.mxu0 %v1580
    %v1681 = vpop.f32.mrf.mxu0
    %v1682 = vadd.f32 %v1608, %v1681
    %v1683 = vpop.f32.mrf.mxu0
    %1684 = vmatprep.mubr.f32.mxu0 0.0
    %1685 = vmatmul.mubr.f32.gmra.mxu0 %v1581
    %v1686 = vpop.f32.mrf.mxu0
    %v1687 = vadd.f32 %v1608, %v1686
    %v1688 = vpop.f32.mrf.mxu0
    %1689 = vmatprep.mubr.f32.mxu0 0.0
    %1690 = vmatmul.mubr.f32.gmra.mxu0 %v1582
    %v1691 = vpop.f32.mrf.mxu0
    %v1692 = vadd.f32 %v1608, %v1691
    %v1693 = vpop.f32.mrf.mxu0
    %1694 = vmatprep.mubr.f32.mxu0 0.0
    %1695 = vmatmul.mubr.f32.gmra.mxu0 %v1583
    %v1696 = vpop.f32.mrf.mxu0
    %v1697 = vadd.f32 %v1608, %v1696
    %v1698 = vpop.f32.mrf.mxu0
    %1699 = vmatprep.mubr.f32.mxu0 0.0
    %1700 = vmatmul.mubr.f32.gmra.mxu0 %v1584
    %v1701 = vpop.f32.mrf.mxu0
    %v1702 = vadd.f32 %v1608, %v1701
    %v1703 = vpop.f32.mrf.mxu0
    %1704 = vmatprep.mubr.f32.mxu0 0.0
    %1705 = vmatmul.mubr.f32.gmra.mxu0 %v1585
    %v1706 = vpop.f32.mrf.mxu0
    %v1707 = vadd.f32 %v1608, %v1706
    %v1708 = vpop.f32.mrf.mxu0
    %1709 = vmatprep.mubr.f32.mxu0 0.0
    %1710 = vmatmul.mubr.f32.gmra.mxu0 %v1586
    %v1711 = vpop.f32.mrf.mxu0
    %v1712 = vadd.f32 %v1608, %v1711
    %v1713 = vpop.f32.mrf.mxu0
    %1714 = vdwg.mxu0
    %1715 = vmax.xlane.f32.xlu0 %v1677
    %v1716 = vpop.xlane.xlu0 %1715
    %1717 = vmax.xlane.f32.xlu0 %v1682
    %v1718 = vpop.xlane.xlu0 %1717
    %1719 = vmax.xlane.f32.xlu0 %v1687
    %v1720 = vpop.xlane.xlu0 %1719
    %1721 = vmax.xlane.f32.xlu0 %v1692
    %v1722 = vpop.xlane.xlu0 %1721
    %1723 = vmax.xlane.f32.xlu0 %v1697
    %v1724 = vpop.xlane.xlu0 %1723
    %1725 = vmax.xlane.f32.xlu0 %v1702
    %v1726 = vpop.xlane.xlu0 %1725
    %1727 = vmax.xlane.f32.xlu0 %v1707
    %v1728 = vpop.xlane.xlu0 %1727
    %1729 = vmax.xlane.f32.xlu0 %v1712
    %v1730 = vpop.xlane.xlu0 %1729
    %v1731 = vsub.f32 %v1677, %v1716
    %v1732 = vsub.f32 %v1682, %v1718
    %v1733 = vsub.f32 %v1687, %v1720
    %v1734 = vsub.f32 %v1692, %v1722
    %v1735 = vsub.f32 %v1697, %v1724
    %v1736 = vsub.f32 %v1702, %v1726
    %v1737 = vsub.f32 %v1707, %v1728
    %v1738 = vsub.f32 %v1712, %v1730
    %v1739 = vmul.f32 %v1731, 1.442695
    %v1740 = vpow.pop %v1739
    %v1741 = vmul.f32 %v1732, 1.442695
    %v1742 = vpow.pop %v1741
    %v1743 = vmul.f32 %v1733, 1.442695
    %v1744 = vpow.pop %v1743
    %v1745 = vmul.f32 %v1734, 1.442695
    %v1746 = vpow.pop %v1745
    %v1747 = vmul.f32 %v1735, 1.442695
    %v1748 = vpow.pop %v1747
    %v1749 = vmul.f32 %v1736, 1.442695
    %v1750 = vpow.pop %v1749
    %v1751 = vmul.f32 %v1737, 1.442695
    %v1752 = vpow.pop %v1751
    %v1753 = vmul.f32 %v1738, 1.442695
    %v1754 = vpow.pop %v1753
    %1755 = vadd.xlane.f32.xlu0 %v1740
    %v1756 = vpop.xlane.xlu0 %1755
    %1757 = vadd.xlane.f32.xlu0 %v1742
    %v1758 = vpop.xlane.xlu0 %1757
    %1759 = vadd.xlane.f32.xlu0 %v1744
    %v1760 = vpop.xlane.xlu0 %1759
    %1761 = vadd.xlane.f32.xlu0 %v1746
    %v1762 = vpop.xlane.xlu0 %1761
    %1763 = vadd.xlane.f32.xlu0 %v1748
    %v1764 = vpop.xlane.xlu0 %1763
    %1765 = vadd.xlane.f32.xlu0 %v1750
    %v1766 = vpop.xlane.xlu0 %1765
    %1767 = vadd.xlane.f32.xlu0 %v1752
    %v1768 = vpop.xlane.xlu0 %1767
    %1769 = vadd.xlane.f32.xlu0 %v1754
    %v1770 = vpop.xlane.xlu0 %1769
    %v1771 = vrcp.pop %v1756
    %v1772 = vmul.f32 %v1740, %v1771
    %v1773 = vrcp.pop %v1758
    %v1774 = vmul.f32 %v1742, %v1773
    %v1775 = vrcp.pop %v1760
    %v1776 = vmul.f32 %v1744, %v1775
    %v1777 = vrcp.pop %v1762
    %v1778 = vmul.f32 %v1746, %v1777
    %v1779 = vrcp.pop %v1764
    %v1780 = vmul.f32 %v1748, %v1779
    %v1781 = vrcp.pop %v1766
    %v1782 = vmul.f32 %v1750, %v1781
    %v1783 = vrcp.pop %v1768
    %v1784 = vmul.f32 %v1752, %v1783
    %v1785 = vrcp.pop %v1770
    %v1786 = vmul.f32 %v1754, %v1785
    %v1787 = vlaneseq
    %v1788 = vshrl.u32 %v1787, 7
    %vm1789 = vcmp.lt.s32.totalorder %v1788, 2
    %v1790 = vsel %vm1789, %v1772, -1.0
    %v1791 = vsel %vm1789, %v1774, -1.0
    %v1792 = vsel %vm1789, %v1776, -1.0
    %v1793 = vsel %vm1789, %v1778, -1.0
    %v1794 = vsel %vm1789, %v1780, -1.0
    %v1795 = vsel %vm1789, %v1782, -1.0
    %v1796 = vsel %vm1789, %v1784, -1.0
    %v1797 = vsel %vm1789, %v1786, -1.0
    %v1798 = vrot.slane %v1790, 4
    %v1799 = vmax.f32 %v1790, %v1798
    %v1800 = vrot.slane %v1799, 2
    %v1801 = vmax.f32 %v1799, %v1800
    %v1802 = vrot.slane %v1801, 1
    %v1803 = vmax.f32 %v1801, %v1802
    %v1804 = vrot.slane %v1791, 4
    %v1805 = vmax.f32 %v1791, %v1804
    %v1806 = vrot.slane %v1805, 2
    %v1807 = vmax.f32 %v1805, %v1806
    %v1808 = vrot.slane %v1807, 1
    %v1809 = vmax.f32 %v1807, %v1808
    %v1810 = vrot.slane %v1792, 4
    %v1811 = vmax.f32 %v1792, %v1810
    %v1812 = vrot.slane %v1811, 2
    %v1813 = vmax.f32 %v1811, %v1812
    %v1814 = vrot.slane %v1813, 1
    %v1815 = vmax.f32 %v1813, %v1814
    %v1816 = vrot.slane %v1793, 4
    %v1817 = vmax.f32 %v1793, %v1816
    %v1818 = vrot.slane %v1817, 2
    %v1819 = vmax.f32 %v1817, %v1818
    %v1820 = vrot.slane %v1819, 1
    %v1821 = vmax.f32 %v1819, %v1820
    %v1822 = vrot.slane %v1794, 4
    %v1823 = vmax.f32 %v1794, %v1822
    %v1824 = vrot.slane %v1823, 2
    %v1825 = vmax.f32 %v1823, %v1824
    %v1826 = vrot.slane %v1825, 1
    %v1827 = vmax.f32 %v1825, %v1826
    %v1828 = vrot.slane %v1795, 4
    %v1829 = vmax.f32 %v1795, %v1828
    %v1830 = vrot.slane %v1829, 2
    %v1831 = vmax.f32 %v1829, %v1830
    %v1832 = vrot.slane %v1831, 1
    %v1833 = vmax.f32 %v1831, %v1832
    %v1834 = vrot.slane %v1796, 4
    %v1835 = vmax.f32 %v1796, %v1834
    %v1836 = vrot.slane %v1835, 2
    %v1837 = vmax.f32 %v1835, %v1836
    %v1838 = vrot.slane %v1837, 1
    %v1839 = vmax.f32 %v1837, %v1838
    %v1840 = vrot.slane %v1797, 4
    %v1841 = vmax.f32 %v1797, %v1840
    %v1842 = vrot.slane %v1841, 2
    %v1843 = vmax.f32 %v1841, %v1842
    %v1844 = vrot.slane %v1843, 1
    %v1845 = vmax.f32 %v1843, %v1844
    %vm1846 = vcmp.eq.f32.partialorder %v1790, %v1803
    %vm1847 = vcmp.eq.f32.partialorder %v1791, %v1809
    %vm1848 = vcmp.eq.f32.partialorder %v1792, %v1815
    %vm1849 = vcmp.eq.f32.partialorder %v1793, %v1821
    %vm1850 = vcmp.eq.f32.partialorder %v1794, %v1827
    %vm1851 = vcmp.eq.f32.partialorder %v1795, %v1833
    %vm1852 = vcmp.eq.f32.partialorder %v1796, %v1839
    %vm1853 = vcmp.eq.f32.partialorder %v1797, %v1845
    %v1854 = vsel %vm1846, %v1788, 8
    %v1855 = vsel %vm1847, %v1788, 8
    %v1856 = vsel %vm1848, %v1788, 8
    %v1857 = vsel %vm1849, %v1788, 8
    %v1858 = vsel %vm1850, %v1788, 8
    %v1859 = vsel %vm1851, %v1788, 8
    %v1860 = vsel %vm1852, %v1788, 8
    %v1861 = vsel %vm1853, %v1788, 8
    %v1862 = vrot.slane %v1854, 4
    %vm1863 = vcmp.lt.s32.totalorder %v1854, %v1862
    %v1864 = vsel %vm1863, %v1854, %v1862
    %v1865 = vrot.slane %v1864, 2
    %vm1866 = vcmp.lt.s32.totalorder %v1864, %v1865
    %v1867 = vsel %vm1866, %v1864, %v1865
    %v1868 = vrot.slane %v1867, 1
    %vm1869 = vcmp.lt.s32.totalorder %v1867, %v1868
    %v1870 = vsel %vm1869, %v1867, %v1868
    %v1871 = vrot.slane %v1855, 4
    %vm1872 = vcmp.lt.s32.totalorder %v1855, %v1871
    %v1873 = vsel %vm1872, %v1855, %v1871
    %v1874 = vrot.slane %v1873, 2
    %vm1875 = vcmp.lt.s32.totalorder %v1873, %v1874
    %v1876 = vsel %vm1875, %v1873, %v1874
    %v1877 = vrot.slane %v1876, 1
    %vm1878 = vcmp.lt.s32.totalorder %v1876, %v1877
    %v1879 = vsel %vm1878, %v1876, %v1877
    %v1880 = vrot.slane %v1856, 4
    %vm1881 = vcmp.lt.s32.totalorder %v1856, %v1880
    %v1882 = vsel %vm1881, %v1856, %v1880
    %v1883 = vrot.slane %v1882, 2
    %vm1884 = vcmp.lt.s32.totalorder %v1882, %v1883
    %v1885 = vsel %vm1884, %v1882, %v1883
    %v1886 = vrot.slane %v1885, 1
    %vm1887 = vcmp.lt.s32.totalorder %v1885, %v1886
    %v1888 = vsel %vm1887, %v1885, %v1886
    %v1889 = vrot.slane %v1857, 4
    %vm1890 = vcmp.lt.s32.totalorder %v1857, %v1889
    %v1891 = vsel %vm1890, %v1857, %v1889
    %v1892 = vrot.slane %v1891, 2
    %vm1893 = vcmp.lt.s32.totalorder %v1891, %v1892
    %v1894 = vsel %vm1893, %v1891, %v1892
    %v1895 = vrot.slane %v1894, 1
    %vm1896 = vcmp.lt.s32.totalorder %v1894, %v1895
    %v1897 = vsel %vm1896, %v1894, %v1895
    %v1898 = vrot.slane %v1858, 4
    %vm1899 = vcmp.lt.s32.totalorder %v1858, %v1898
    %v1900 = vsel %vm1899, %v1858, %v1898
    %v1901 = vrot.slane %v1900, 2
    %vm1902 = vcmp.lt.s32.totalorder %v1900, %v1901
    %v1903 = vsel %vm1902, %v1900, %v1901
    %v1904 = vrot.slane %v1903, 1
    %vm1905 = vcmp.lt.s32.totalorder %v1903, %v1904
    %v1906 = vsel %vm1905, %v1903, %v1904
    %v1907 = vrot.slane %v1859, 4
    %vm1908 = vcmp.lt.s32.totalorder %v1859, %v1907
    %v1909 = vsel %vm1908, %v1859, %v1907
    %v1910 = vrot.slane %v1909, 2
    %vm1911 = vcmp.lt.s32.totalorder %v1909, %v1910
    %v1912 = vsel %vm1911, %v1909, %v1910
    %v1913 = vrot.slane %v1912, 1
    %vm1914 = vcmp.lt.s32.totalorder %v1912, %v1913
    %v1915 = vsel %vm1914, %v1912, %v1913
    %v1916 = vrot.slane %v1860, 4
    %vm1917 = vcmp.lt.s32.totalorder %v1860, %v1916
    %v1918 = vsel %vm1917, %v1860, %v1916
    %v1919 = vrot.slane %v1918, 2
    %vm1920 = vcmp.lt.s32.totalorder %v1918, %v1919
    %v1921 = vsel %vm1920, %v1918, %v1919
    %v1922 = vrot.slane %v1921, 1
    %vm1923 = vcmp.lt.s32.totalorder %v1921, %v1922
    %v1924 = vsel %vm1923, %v1921, %v1922
    %v1925 = vrot.slane %v1861, 4
    %vm1926 = vcmp.lt.s32.totalorder %v1861, %v1925
    %v1927 = vsel %vm1926, %v1861, %v1925
    %v1928 = vrot.slane %v1927, 2
    %vm1929 = vcmp.lt.s32.totalorder %v1927, %v1928
    %v1930 = vsel %vm1929, %v1927, %v1928
    %v1931 = vrot.slane %v1930, 1
    %vm1932 = vcmp.lt.s32.totalorder %v1930, %v1931
    %v1933 = vsel %vm1932, %v1930, %v1931
    %v1934 = vcvt.s32.f32 %v1870
    %v1935 = vcvt.s32.f32 %v1879
    %v1936 = vcvt.s32.f32 %v1888
    %v1937 = vcvt.s32.f32 %v1897
    %v1938 = vcvt.s32.f32 %v1906
    %v1939 = vcvt.s32.f32 %v1915
    %v1940 = vcvt.s32.f32 %v1924
    %v1941 = vcvt.s32.f32 %v1933
    %vm1950 = vcmask 1041409
    %v1951 = vsel %vm1950, %v1935, %v1934
    %vm1952 = vcmask 1042434
    %v1953 = vsel %vm1952, %v1936, %v1951
    %vm1954 = vcmask 1043459
    %v1955 = vsel %vm1954, %v1937, %v1953
    %vm1956 = vcmask 1044484
    %v1957 = vsel %vm1956, %v1938, %v1955
    %vm1958 = vcmask 1045509
    %v1959 = vsel %vm1958, %v1939, %v1957
    %vm1960 = vcmask 1046534
    %v1961 = vsel %vm1960, %v1940, %v1959
    %vm1962 = vcmask 1047559
    %v1963 = vsel %vm1962, %v1941, %v1961
    %1965 = vst [vmem:[#allocation14] sm:$0xff] %v1963
    // Predicated region
    $region62: #{tpu_custom_call.1} parent=1 // pred_check
      _
    $region63: #{tpu_custom_call.1} parent=1 // pred_check_branch
      %1967 = sbr.rel (0) target = $region65
    $region64: #{tpu_custom_call.1} parent=1 // pred_region
      %s1969 = ssub.s32 128, 128
      %1970 = vsyncadd [#allocation5], %s1969
      %s1972 = sshll.u32 [#allocation14], 4
      %s1973 = int_to_ptr.vmem [resolvable:$true] %s1972
      %1975 = dma.vmem_to_hbm [thread:$0]  %s1973, 128, %s9, [#allocation5]
    $region65: #{tpu_custom_call.1} parent=1 // pred_fallthru
      _
    // Predicated region
    $region66: #{tpu_custom_call.1} parent=1 // pred_check
      _
    $region67: #{tpu_custom_call.1} parent=1 // pred_check_branch
      %1977 = sbr.rel (0) target = $region69
    $region68: #{tpu_custom_call.1} parent=1 // pred_region
      %1978 = dma.done [#allocation5], 128
    $region69: #{tpu_custom_call.1} parent=1 // pred_fallthru
      _
    %1979 = vsyncpa [#allocation4], 1
    %1980 = vsyncpa [#allocation7], 1
    %1981 = vsyncpa [#allocation10], 1
    %1982 = vsyncpa [#allocation13], 1
    %1983 = vsyncpa [#allocation5], 1

</llo_original>
